<compile_context>
chip_gen: v6e
topology: v6e:2x2x1
jax: 0.10.0
libtpu: 0.0.40
codegen_flags: <defaults>
</compile_context>

<pallas_src>
import math
import functools

import jax
import jax.numpy as jnp
from jax import lax
from jax.experimental import pallas as pl
from jax.experimental.pallas import tpu as pltpu

LN_EPS = 1e-5


# ---------------------------------------------------------------------------
# in-kernel helpers
# ---------------------------------------------------------------------------
def _erf_approx(x):
    # Abramowitz & Stegun 7.1.26 (max abs error ~1.5e-7), built from ops Mosaic lowers cleanly.
    a1, a2, a3, a4, a5 = 0.254829592, -0.284496736, 1.421413741, -1.453152027, 1.061405429
    p = 0.3275911
    ax = jnp.abs(x)
    t = 1.0 / (1.0 + p * ax)
    poly = ((((a5 * t + a4) * t + a3) * t + a2) * t + a1) * t
    y = 1.0 - poly * jnp.exp(-ax * ax)
    return jnp.where(x >= 0.0, y, -y)


def _gelu(x):
    # exact (erf) GELU, matching torch.nn.functional.gelu default
    return 0.5 * x * (1.0 + _erf_approx(x * (1.0 / math.sqrt(2.0))))


# ---------------------------------------------------------------------------
# Fused kernel: per-head cross-slice attention (folded projections) + linear1
#               + GELU + residual + full-tensor LN + linear2 + GELU + residual
#               + full-tensor LN + AvgPool, all resident in VMEM.
# ---------------------------------------------------------------------------
def fused_kernel(pf_ref, feat_ref, gk_ref, km_ref, w2_ref, b1_ref, b2_ref,
                 r_ref, rt_ref, mask_ref, pmat_ref, out_ref, pool_ref,
                 *, heads, scale):
    pf = pf_ref[...]        # (B, C*P)      pooled features, NCHW-flattened per slice
    feat = feat_ref[...]    # (B*C, S)      features, NCHW-flattened over (H,W)
    R = r_ref[...]          # (B*C, B)      constant expansion
    RT = rt_ref[...]        # (B, B*C)
    mask = mask_ref[...]    # (B*C, B*C)    kron(ones(B,B), eye(C))
    BC = feat.shape[0]

    # Accumulate all heads into a single (B*C, B*C) mixing matrix:
    #   w_mix = sum_h kron(attn_h, I_C) @ kron(I_B, (wv_h @ w1_h)^T)
    w_mix = jnp.zeros((BC, BC), dtype=jnp.float32)
    for h in range(heads):                                   # static unroll (heads is tiny)
        # scores_h = pf @ kron(wq_h wk_h^T, I_P) @ pf^T  (q/k 1x1-convs folded at init)
        t = jnp.dot(pf, gk_ref[h], preferred_element_type=jnp.float32)        # (B, C*P)
        s = lax.dot_general(t, pf, (((1,), (1,)), ((), ())),
                            preferred_element_type=jnp.float32) * scale       # (B, B)
        m = jnp.max(s, axis=1, keepdims=True)
        e = jnp.exp(s - m)
        attn = e * pl.reciprocal(jnp.sum(e, axis=1, keepdims=True), approx=True)
        # kron(attn, I_C) built with two tiny matmuls + constant eye-mask (no reshapes)
        a_big = jnp.dot(jnp.dot(R, attn, preferred_element_type=jnp.float32), RT,
                        preferred_element_type=jnp.float32) * mask            # (B*C, B*C)
        w_mix = w_mix + jnp.dot(a_big, km_ref[h], preferred_element_type=jnp.float32)

    # linear1 (all heads + attention mixing) as one lane-dense matmul, then GELU + residual
    y1 = jnp.dot(w_mix, feat, preferred_element_type=jnp.float32) + b1_ref[...]
    x1 = _gelu(y1) + feat

    # full-tensor LayerNorm #1 (single-pass stats, biased variance, affine = identity at init)
    inv_n = 1.0 / x1.size
    mu1 = jnp.sum(x1) * inv_n
    var1 = jnp.sum(x1 * x1) * inv_n - mu1 * mu1
    n1 = (x1 - mu1) * lax.rsqrt(var1 + LN_EPS)

    # linear2 + GELU + residual + full-tensor LayerNorm #2
    y2 = jnp.dot(w2_ref[...], n1, preferred_element_type=jnp.float32) + b2_ref[...]
    x2 = _gelu(y2) + n1
    mu2 = jnp.sum(x2) * inv_n
    var2 = jnp.sum(x2 * x2) * inv_n - mu2 * mu2
    n2 = (x2 - mu2) * lax.rsqrt(var2 + LN_EPS)

    out_ref[...] = n2                                                         # (B*C, S)
    # AvgPool2d as a constant-matrix matmul (fused, no extra launch / HBM trip)
    pool_ref[...] = jnp.dot(n2, pmat_ref[...], preferred_element_type=jnp.float32)


# ---------------------------------------------------------------------------
# Module wrapper: raw parameters + weight-only folding (done once at init)
# ---------------------------------------------------------------------------
class MultiHeadedCrossSliceAttentionPallas:
    def __init__(self, input_channels, heads=3, pool_kernel_size=(4, 4),
                 input_size=(16, 16), batch_size=4, key=None):
        C = input_channels
        self.C, self.heads = C, heads
        self.kh, self.kw = pool_kernel_size
        self.H, self.W = input_size
        self.B = batch_size
        key = jax.random.PRNGKey(0) if key is None else key
        ks = jax.random.split(key, 7)
        sc = 1.0 / math.sqrt(C)
        # per-head 1x1-conv weights (no bias), stored as (C_in, C_out) matmul matrices
        self.wq = jax.random.normal(ks[0], (heads, C, C), jnp.float32) * sc
        self.wk = jax.random.normal(ks[1], (heads, C, C), jnp.float32) * sc
        self.wv = jax.random.normal(ks[2], (heads, C, C), jnp.float32) * sc
        # linear1: 1x1 conv heads*C -> C (bias), linear2: C -> C (bias)
        self.w1 = jax.random.normal(ks[3], (heads * C, C), jnp.float32) / math.sqrt(heads * C)
        self.b1 = jax.random.normal(ks[4], (1, C), jnp.float32) * 0.1
        self.w2 = jax.random.normal(ks[5], (C, C), jnp.float32) * sc
        self.b2 = jax.random.normal(ks[6], (1, C), jnp.float32) * 0.1
        # LayerNorm affine params: default torch init (weight=1, bias=0) -> identity affine.

        # ---- derived kernel operands (weight-only / shape-only, computed once) ----
        B, H, W, kh, kw = batch_size, self.H, self.W, self.kh, self.kw
        Hp, Wp = H // kh, W // kw
        self.P, self.S = Hp * Wp, H * W
        P, S = self.P, self.S
        eyeP = jnp.eye(P, dtype=jnp.float32)
        eyeB = jnp.eye(B, dtype=jnp.float32)
        eyeC = jnp.eye(C, dtype=jnp.float32)
        # q/k folding: scores_h = pf_flat @ kron(wq_h wk_h^T, I_P) @ pf_flat^T
        self.Gk = jnp.stack([jnp.kron(self.wq[h] @ self.wk[h].T, eyeP)
                             for h in range(heads)])                      # (heads, C*P, C*P)
        # v + head-slice-of-linear1 folding, NCHW-flat layout
        w1h = self.w1.reshape(heads, C, C)
        self.KM = jnp.stack([jnp.kron(eyeB, (self.wv[h] @ w1h[h]).T)
                             for h in range(heads)])                      # (heads, B*C, B*C)
        self.W2bd = jnp.kron(eyeB, self.w2.T)                             # (B*C, B*C)
        self.b1col = jnp.tile(self.b1.reshape(C, 1), (B, 1))              # (B*C, 1)
        self.b2col = jnp.tile(self.b2.reshape(C, 1), (B, 1))              # (B*C, 1)
        # constants used in-kernel to expand attn (B,B) into kron(attn, I_C)
        self.R = jnp.kron(eyeB, jnp.ones((C, 1), jnp.float32))            # (B*C, B)
        self.RT = self.R.T                                                # (B, B*C)
        self.maskI = jnp.kron(jnp.ones((B, B), jnp.float32), eyeC)        # (B*C, B*C)
        # AvgPool2d(kh,kw) as a constant (S, npool) matrix in NCHW-flat layout
        oh = jnp.arange(H) // kh
        ow = jnp.arange(W) // kw
        oidx = (oh[:, None] * (W // kw) + ow[None, :]).reshape(-1)
        self.npool = (H // kh) * (W // kw)
        self.PmatT = (oidx[:, None] == jnp.arange(self.npool)[None, :]).astype(jnp.float32) / (
            kh * kw)

        vmem = pl.BlockSpec(memory_space=pltpu.MemorySpace.VMEM)
        self._fused = pl.pallas_call(
            functools.partial(fused_kernel, heads=heads, scale=1.0 / math.sqrt(C * P)),
            out_shape=(jax.ShapeDtypeStruct((B * C, S), jnp.float32),
                       jax.ShapeDtypeStruct((B * C, self.npool), jnp.float32)),
            in_specs=[vmem] * 11,
            out_specs=(vmem, vmem),
        )

    def __call__(self, pooled_features, features):
        # NCHW in, NCHW out (PyTorch convention); only free reshapes on the wrapper side.
        B, C, Hp, Wp = pooled_features.shape
        _, _, H, W = features.shape
        pf_flat = pooled_features.reshape(B, C * Hp * Wp)        # (B, C*P)
        feat_f = features.reshape(B * C, H * W)                  # (B*C, S)
        out_f, pool_f = self._fused(pf_flat, feat_f, self.Gk, self.KM, self.W2bd,
                                    self.b1col, self.b2col, self.R, self.RT,
                                    self.maskI, self.PmatT)
        out = out_f.reshape(B, C, H, W)
        pooled_out = pool_f.reshape(B, C, H // self.kh, W // self.kw)
        return pooled_out, out


# ---------------------------------------------------------------------------
# Pure-JAX reference (mirrors the PyTorch math, unfolded) for verification
# ---------------------------------------------------------------------------
def reference_forward(m, pooled_features, features):
    B, C, _, _ = pooled_features.shape
    _, _, H, W = features.shape
    pf = jnp.transpose(pooled_features, (0, 2, 3, 1))    # (B,Hp,Wp,C)
    ft = jnp.transpose(features, (0, 2, 3, 1))           # (B,H,W,C)
    hp = 'highest'
    outs = []
    for h in range(m.heads):
        q = jnp.einsum('bhwc,cd->bhwd', pf, m.wq[h], precision=hp).reshape(B, -1)
        k = jnp.einsum('bhwc,cd->bhwd', pf, m.wk[h], precision=hp).reshape(B, -1)
        v = jnp.einsum('bhwc,cd->bhwd', ft, m.wv[h], precision=hp)
        s = jnp.einsum('id,jd->ij', q, k, precision=hp) / jnp.sqrt(jnp.float32(q.shape[1]))
        attn = jax.nn.softmax(s, axis=1)
        outs.append(jnp.einsum('ij,jhwc->ihwc', attn, v, precision=hp))
    cat = jnp.concatenate(outs, axis=-1)                  # (B,H,W,heads*C)

    y1 = jnp.einsum('bhwk,kd->bhwd', cat, m.w1, precision=hp) + m.b1.reshape(1, 1, 1, C)
    x1 = jax.nn.gelu(y1, approximate=False) + ft
    mu1, var1 = x1.mean(), ((x1 - x1.mean()) ** 2).mean()
    n1 = (x1 - mu1) / jnp.sqrt(var1 + LN_EPS)

    y2 = jnp.einsum('bhwc,cd->bhwd', n1, m.w2, precision=hp) + m.b2.reshape(1, 1, 1, C)
    x2 = jax.nn.gelu(y2, approximate=False) + n1
    mu2, var2 = x2.mean(), ((x2 - x2.mean()) ** 2).mean()
    out_nhwc = (x2 - mu2) / jnp.sqrt(var2 + LN_EPS)

    out = jnp.transpose(out_nhwc, (0, 3, 1, 2))           # NCHW
    pooled = out.reshape(B, C, H // m.kh, m.kh, W // m.kw, m.kw).mean(axis=(3, 5))
    return pooled, out


if __name__ == "__main__":
    B, C, H, W = 4, 4, 16, 16
    heads = 3
    kh, kw = 4, 4

    key = jax.random.PRNGKey(0)
    k1, k2, k3 = jax.random.split(key, 3)
    features = jax.random.normal(k1, (B, C, H, W), jnp.float32)
    pooled_features = jax.random.normal(k2, (B, C, H // kh, W // kw), jnp.float32)

    module = MultiHeadedCrossSliceAttentionPallas(
        C, heads=heads, pool_kernel_size=(kh, kw), input_size=(H, W), batch_size=B, key=k3)

    pooled_out, out = module(pooled_features, features)
    jax.block_until_ready((pooled_out, out))

    ref_pooled, ref_out = reference_forward(module, pooled_features, features)
    assert pooled_out.shape == (B, C, H // kh, W // kw)
    assert out.shape == (B, C, H // 1, W // 1)
    # f32 everywhere except pl.reciprocal(approx=True) in the softmax -> 1e-2 tolerance
    assert jnp.allclose(out, ref_out, atol=1e-2, rtol=1e-2), "output mismatch vs reference"
    assert jnp.allclose(pooled_out, ref_pooled, atol=1e-2, rtol=1e-2), "pooled mismatch vs reference"

    print("KERNEL_OK")
</pallas_src>

<mosaic_0001>
module attributes {stable_mosaic.version = 11 : i64} {
  func.func @fused_kernel(%arg0: memref<4x64xf32, #tpu.memory_space<vmem>>, %arg1: memref<16x256xf32, #tpu.memory_space<vmem>>, %arg2: memref<3x64x64xf32, #tpu.memory_space<vmem>>, %arg3: memref<3x16x16xf32, #tpu.memory_space<vmem>>, %arg4: memref<16x16xf32, #tpu.memory_space<vmem>>, %arg5: memref<16x1xf32, #tpu.memory_space<vmem>>, %arg6: memref<16x1xf32, #tpu.memory_space<vmem>>, %arg7: memref<16x4xf32, #tpu.memory_space<vmem>>, %arg8: memref<4x16xf32, #tpu.memory_space<vmem>>, %arg9: memref<16x16xf32, #tpu.memory_space<vmem>>, %arg10: memref<256x16xf32, #tpu.memory_space<vmem>>, %arg11: memref<16x256xf32, #tpu.memory_space<vmem>>, %arg12: memref<16x16xf32, #tpu.memory_space<vmem>>) attributes {dimension_semantics = [], scalar_prefetch = 0 : i64, scratch_operands = 0 : i64, tpu.core_type = #tpu.core_type<tc>} {
    %c0 = arith.constant 0 : index
    %c0_0 = arith.constant 0 : index
    %0 = vector.load %arg0[%c0, %c0_0] : memref<4x64xf32, #tpu.memory_space<vmem>>, vector<4x64xf32>
    %c0_1 = arith.constant 0 : index
    %c0_2 = arith.constant 0 : index
    %1 = vector.load %arg1[%c0_1, %c0_2] : memref<16x256xf32, #tpu.memory_space<vmem>>, vector<16x256xf32>
    %c0_3 = arith.constant 0 : index
    %c0_4 = arith.constant 0 : index
    %2 = vector.load %arg7[%c0_3, %c0_4] : memref<16x4xf32, #tpu.memory_space<vmem>>, vector<16x4xf32>
    %c0_5 = arith.constant 0 : index
    %c0_6 = arith.constant 0 : index
    %3 = vector.load %arg8[%c0_5, %c0_6] : memref<4x16xf32, #tpu.memory_space<vmem>>, vector<4x16xf32>
    %c0_7 = arith.constant 0 : index
    %c0_8 = arith.constant 0 : index
    %4 = vector.load %arg9[%c0_7, %c0_8] : memref<16x16xf32, #tpu.memory_space<vmem>>, vector<16x16xf32>
    %cst = arith.constant 0.000000e+00 : f32
    %5 = vector.broadcast %cst : f32 to vector<16x16xf32>
    %c0_9 = arith.constant 0 : index
    %c0_10 = arith.constant 0 : index
    %c0_11 = arith.constant 0 : index
    %6 = vector.load %arg2[%c0_9, %c0_10, %c0_11] : memref<3x64x64xf32, #tpu.memory_space<vmem>>, vector<1x64x64xf32>
    %7 = vector.shape_cast %6 : vector<1x64x64xf32> to vector<64x64xf32>
    %cst_12 = arith.constant dense<0.000000e+00> : vector<4x64xf32>
    %8 = tpu.matmul %0, %7, %cst_12 {dimension_numbers = #tpu.dot_dimension_numbers<[1], [0], [0], [1], [0, 0, 1, 1], [], []>} : vector<4x64xf32>, vector<64x64xf32>, vector<4x64xf32> -> vector<4x64xf32>
    %cst_13 = arith.constant dense<0.000000e+00> : vector<4x4xf32>
    %9 = tpu.matmul %8, %0, %cst_13 {dimension_numbers = #tpu.dot_dimension_numbers<[1], [1], [0], [0], [0, 0, 1, 0], [], []>} : vector<4x64xf32>, vector<4x64xf32>, vector<4x4xf32> -> vector<4x4xf32>
    %cst_14 = arith.constant 1.250000e-01 : f32
    %10 = vector.broadcast %cst_14 : f32 to vector<4x4xf32>
    %11 = arith.mulf %9, %10 : vector<4x4xf32>
    %cst_15 = arith.constant dense<0xFF800000> : vector<4xf32>
    %12 = vector.multi_reduction <maximumf>, %11, %cst_15 [1] : vector<4x4xf32> to vector<4xf32>
    %13 = vector.shape_cast %12 : vector<4xf32> to vector<4x1xf32>
    %14 = vector.broadcast %13 : vector<4x1xf32> to vector<4x4xf32>
    %15 = arith.subf %11, %14 : vector<4x4xf32>
    %16 = math.exp %15 : vector<4x4xf32>
    %cst_16 = arith.constant dense<0.000000e+00> : vector<4xf32>
    %17 = vector.multi_reduction <add>, %16, %cst_16 [1] : vector<4x4xf32> to vector<4xf32>
    %18 = vector.shape_cast %17 : vector<4xf32> to vector<4x1xf32>
    %19 = tpu.reciprocal %18 {approx = true} : vector<4x1xf32> -> vector<4x1xf32>
    %20 = vector.broadcast %19 : vector<4x1xf32> to vector<4x4xf32>
    %21 = arith.mulf %16, %20 : vector<4x4xf32>
    %cst_17 = arith.constant dense<0.000000e+00> : vector<16x4xf32>
    %22 = tpu.matmul %2, %21, %cst_17 {dimension_numbers = #tpu.dot_dimension_numbers<[1], [0], [0], [1], [0, 0, 1, 1], [], []>} : vector<16x4xf32>, vector<4x4xf32>, vector<16x4xf32> -> vector<16x4xf32>
    %cst_18 = arith.constant dense<0.000000e+00> : vector<16x16xf32>
    %23 = tpu.matmul %22, %3, %cst_18 {dimension_numbers = #tpu.dot_dimension_numbers<[1], [0], [0], [1], [0, 0, 1, 1], [], []>} : vector<16x4xf32>, vector<4x16xf32>, vector<16x16xf32> -> vector<16x16xf32>
    %24 = arith.mulf %23, %4 : vector<16x16xf32>
    %c0_19 = arith.constant 0 : index
    %c0_20 = arith.constant 0 : index
    %c0_21 = arith.constant 0 : index
    %25 = vector.load %arg3[%c0_19, %c0_20, %c0_21] : memref<3x16x16xf32, #tpu.memory_space<vmem>>, vector<1x16x16xf32>
    %26 = vector.shape_cast %25 : vector<1x16x16xf32> to vector<16x16xf32>
    %cst_22 = arith.constant dense<0.000000e+00> : vector<16x16xf32>
    %27 = tpu.matmul %24, %26, %cst_22 {dimension_numbers = #tpu.dot_dimension_numbers<[1], [0], [0], [1], [0, 0, 1, 1], [], []>} : vector<16x16xf32>, vector<16x16xf32>, vector<16x16xf32> -> vector<16x16xf32>
    %28 = arith.addf %5, %27 : vector<16x16xf32>
    %c1 = arith.constant 1 : index
    %c0_23 = arith.constant 0 : index
    %c0_24 = arith.constant 0 : index
    %29 = vector.load %arg2[%c1, %c0_23, %c0_24] : memref<3x64x64xf32, #tpu.memory_space<vmem>>, vector<1x64x64xf32>
    %30 = vector.shape_cast %29 : vector<1x64x64xf32> to vector<64x64xf32>
    %cst_25 = arith.constant dense<0.000000e+00> : vector<4x64xf32>
    %31 = tpu.matmul %0, %30, %cst_25 {dimension_numbers = #tpu.dot_dimension_numbers<[1], [0], [0], [1], [0, 0, 1, 1], [], []>} : vector<4x64xf32>, vector<64x64xf32>, vector<4x64xf32> -> vector<4x64xf32>
    %cst_26 = arith.constant dense<0.000000e+00> : vector<4x4xf32>
    %32 = tpu.matmul %31, %0, %cst_26 {dimension_numbers = #tpu.dot_dimension_numbers<[1], [1], [0], [0], [0, 0, 1, 0], [], []>} : vector<4x64xf32>, vector<4x64xf32>, vector<4x4xf32> -> vector<4x4xf32>
    %cst_27 = arith.constant 1.250000e-01 : f32
    %33 = vector.broadcast %cst_27 : f32 to vector<4x4xf32>
    %34 = arith.mulf %32, %33 : vector<4x4xf32>
    %cst_28 = arith.constant dense<0xFF800000> : vector<4xf32>
    %35 = vector.multi_reduction <maximumf>, %34, %cst_28 [1] : vector<4x4xf32> to vector<4xf32>
    %36 = vector.shape_cast %35 : vector<4xf32> to vector<4x1xf32>
    %37 = vector.broadcast %36 : vector<4x1xf32> to vector<4x4xf32>
    %38 = arith.subf %34, %37 : vector<4x4xf32>
    %39 = math.exp %38 : vector<4x4xf32>
    %cst_29 = arith.constant dense<0.000000e+00> : vector<4xf32>
    %40 = vector.multi_reduction <add>, %39, %cst_29 [1] : vector<4x4xf32> to vector<4xf32>
    %41 = vector.shape_cast %40 : vector<4xf32> to vector<4x1xf32>
    %42 = tpu.reciprocal %41 {approx = true} : vector<4x1xf32> -> vector<4x1xf32>
    %43 = vector.broadcast %42 : vector<4x1xf32> to vector<4x4xf32>
    %44 = arith.mulf %39, %43 : vector<4x4xf32>
    %cst_30 = arith.constant dense<0.000000e+00> : vector<16x4xf32>
    %45 = tpu.matmul %2, %44, %cst_30 {dimension_numbers = #tpu.dot_dimension_numbers<[1], [0], [0], [1], [0, 0, 1, 1], [], []>} : vector<16x4xf32>, vector<4x4xf32>, vector<16x4xf32> -> vector<16x4xf32>
    %cst_31 = arith.constant dense<0.000000e+00> : vector<16x16xf32>
    %46 = tpu.matmul %45, %3, %cst_31 {dimension_numbers = #tpu.dot_dimension_numbers<[1], [0], [0], [1], [0, 0, 1, 1], [], []>} : vector<16x4xf32>, vector<4x16xf32>, vector<16x16xf32> -> vector<16x16xf32>
    %47 = arith.mulf %46, %4 : vector<16x16xf32>
    %c1_32 = arith.constant 1 : index
    %c0_33 = arith.constant 0 : index
    %c0_34 = arith.constant 0 : index
    %48 = vector.load %arg3[%c1_32, %c0_33, %c0_34] : memref<3x16x16xf32, #tpu.memory_space<vmem>>, vector<1x16x16xf32>
    %49 = vector.shape_cast %48 : vector<1x16x16xf32> to vector<16x16xf32>
    %cst_35 = arith.constant dense<0.000000e+00> : vector<16x16xf32>
    %50 = tpu.matmul %47, %49, %cst_35 {dimension_numbers = #tpu.dot_dimension_numbers<[1], [0], [0], [1], [0, 0, 1, 1], [], []>} : vector<16x16xf32>, vector<16x16xf32>, vector<16x16xf32> -> vector<16x16xf32>
    %51 = arith.addf %28, %50 : vector<16x16xf32>
    %c2 = arith.constant 2 : index
    %c0_36 = arith.constant 0 : index
    %c0_37 = arith.constant 0 : index
    %52 = vector.load %arg2[%c2, %c0_36, %c0_37] : memref<3x64x64xf32, #tpu.memory_space<vmem>>, vector<1x64x64xf32>
    %53 = vector.shape_cast %52 : vector<1x64x64xf32> to vector<64x64xf32>
    %cst_38 = arith.constant dense<0.000000e+00> : vector<4x64xf32>
    %54 = tpu.matmul %0, %53, %cst_38 {dimension_numbers = #tpu.dot_dimension_numbers<[1], [0], [0], [1], [0, 0, 1, 1], [], []>} : vector<4x64xf32>, vector<64x64xf32>, vector<4x64xf32> -> vector<4x64xf32>
    %cst_39 = arith.constant dense<0.000000e+00> : vector<4x4xf32>
    %55 = tpu.matmul %54, %0, %cst_39 {dimension_numbers = #tpu.dot_dimension_numbers<[1], [1], [0], [0], [0, 0, 1, 0], [], []>} : vector<4x64xf32>, vector<4x64xf32>, vector<4x4xf32> -> vector<4x4xf32>
    %cst_40 = arith.constant 1.250000e-01 : f32
    %56 = vector.broadcast %cst_40 : f32 to vector<4x4xf32>
    %57 = arith.mulf %55, %56 : vector<4x4xf32>
    %cst_41 = arith.constant dense<0xFF800000> : vector<4xf32>
    %58 = vector.multi_reduction <maximumf>, %57, %cst_41 [1] : vector<4x4xf32> to vector<4xf32>
    %59 = vector.shape_cast %58 : vector<4xf32> to vector<4x1xf32>
    %60 = vector.broadcast %59 : vector<4x1xf32> to vector<4x4xf32>
    %61 = arith.subf %57, %60 : vector<4x4xf32>
    %62 = math.exp %61 : vector<4x4xf32>
    %cst_42 = arith.constant dense<0.000000e+00> : vector<4xf32>
    %63 = vector.multi_reduction <add>, %62, %cst_42 [1] : vector<4x4xf32> to vector<4xf32>
    %64 = vector.shape_cast %63 : vector<4xf32> to vector<4x1xf32>
    %65 = tpu.reciprocal %64 {approx = true} : vector<4x1xf32> -> vector<4x1xf32>
    %66 = vector.broadcast %65 : vector<4x1xf32> to vector<4x4xf32>
    %67 = arith.mulf %62, %66 : vector<4x4xf32>
    %cst_43 = arith.constant dense<0.000000e+00> : vector<16x4xf32>
    %68 = tpu.matmul %2, %67, %cst_43 {dimension_numbers = #tpu.dot_dimension_numbers<[1], [0], [0], [1], [0, 0, 1, 1], [], []>} : vector<16x4xf32>, vector<4x4xf32>, vector<16x4xf32> -> vector<16x4xf32>
    %cst_44 = arith.constant dense<0.000000e+00> : vector<16x16xf32>
    %69 = tpu.matmul %68, %3, %cst_44 {dimension_numbers = #tpu.dot_dimension_numbers<[1], [0], [0], [1], [0, 0, 1, 1], [], []>} : vector<16x4xf32>, vector<4x16xf32>, vector<16x16xf32> -> vector<16x16xf32>
    %70 = arith.mulf %69, %4 : vector<16x16xf32>
    %c2_45 = arith.constant 2 : index
    %c0_46 = arith.constant 0 : index
    %c0_47 = arith.constant 0 : index
    %71 = vector.load %arg3[%c2_45, %c0_46, %c0_47] : memref<3x16x16xf32, #tpu.memory_space<vmem>>, vector<1x16x16xf32>
    %72 = vector.shape_cast %71 : vector<1x16x16xf32> to vector<16x16xf32>
    %cst_48 = arith.constant dense<0.000000e+00> : vector<16x16xf32>
    %73 = tpu.matmul %70, %72, %cst_48 {dimension_numbers = #tpu.dot_dimension_numbers<[1], [0], [0], [1], [0, 0, 1, 1], [], []>} : vector<16x16xf32>, vector<16x16xf32>, vector<16x16xf32> -> vector<16x16xf32>
    %74 = arith.addf %51, %73 : vector<16x16xf32>
    %cst_49 = arith.constant dense<0.000000e+00> : vector<16x256xf32>
    %75 = tpu.matmul %74, %1, %cst_49 {dimension_numbers = #tpu.dot_dimension_numbers<[1], [0], [0], [1], [0, 0, 1, 1], [], []>} : vector<16x16xf32>, vector<16x256xf32>, vector<16x256xf32> -> vector<16x256xf32>
    %c0_50 = arith.constant 0 : index
    %c0_51 = arith.constant 0 : index
    %76 = vector.load %arg5[%c0_50, %c0_51] : memref<16x1xf32, #tpu.memory_space<vmem>>, vector<16x1xf32>
    %77 = vector.broadcast %76 : vector<16x1xf32> to vector<16x256xf32>
    %78 = arith.addf %75, %77 : vector<16x256xf32>
    %cst_52 = arith.constant 5.000000e-01 : f32
    %79 = vector.broadcast %cst_52 : f32 to vector<16x256xf32>
    %80 = arith.mulf %79, %78 : vector<16x256xf32>
    %cst_53 = arith.constant 0.707106769 : f32
    %81 = vector.broadcast %cst_53 : f32 to vector<16x256xf32>
    %82 = arith.mulf %78, %81 : vector<16x256xf32>
    %83 = math.absf %82 : vector<16x256xf32>
    %cst_54 = arith.constant 0.327591091 : f32
    %84 = vector.broadcast %cst_54 : f32 to vector<16x256xf32>
    %85 = arith.mulf %84, %83 : vector<16x256xf32>
    %cst_55 = arith.constant 1.000000e+00 : f32
    %86 = vector.broadcast %cst_55 : f32 to vector<16x256xf32>
    %87 = arith.addf %86, %85 : vector<16x256xf32>
    %cst_56 = arith.constant 1.000000e+00 : f32
    %88 = vector.broadcast %cst_56 : f32 to vector<16x256xf32>
    %89 = arith.divf %88, %87 : vector<16x256xf32>
    %cst_57 = arith.constant 1.06140542 : f32
    %90 = vector.broadcast %cst_57 : f32 to vector<16x256xf32>
    %91 = arith.mulf %90, %89 : vector<16x256xf32>
    %cst_58 = arith.constant -1.45315206 : f32
    %92 = vector.broadcast %cst_58 : f32 to vector<16x256xf32>
    %93 = arith.addf %91, %92 : vector<16x256xf32>
    %94 = arith.mulf %93, %89 : vector<16x256xf32>
    %cst_59 = arith.constant 1.42141378 : f32
    %95 = vector.broadcast %cst_59 : f32 to vector<16x256xf32>
    %96 = arith.addf %94, %95 : vector<16x256xf32>
    %97 = arith.mulf %96, %89 : vector<16x256xf32>
    %cst_60 = arith.constant -0.284496725 : f32
    %98 = vector.broadcast %cst_60 : f32 to vector<16x256xf32>
    %99 = arith.addf %97, %98 : vector<16x256xf32>
    %100 = arith.mulf %99, %89 : vector<16x256xf32>
    %cst_61 = arith.constant 0.254829586 : f32
    %101 = vector.broadcast %cst_61 : f32 to vector<16x256xf32>
    %102 = arith.addf %100, %101 : vector<16x256xf32>
    %103 = arith.mulf %102, %89 : vector<16x256xf32>
    %cst_62 = arith.constant 0.000000e+00 : f32
    %104 = vector.broadcast %cst_62 : f32 to vector<16x256xf32>
    %105 = arith.subf %104, %83 : vector<16x256xf32>
    %106 = arith.mulf %105, %83 : vector<16x256xf32>
    %107 = math.exp %106 : vector<16x256xf32>
    %108 = arith.mulf %103, %107 : vector<16x256xf32>
    %cst_63 = arith.constant 1.000000e+00 : f32
    %109 = vector.broadcast %cst_63 : f32 to vector<16x256xf32>
    %110 = arith.subf %109, %108 : vector<16x256xf32>
    %cst_64 = arith.constant 0.000000e+00 : f32
    %111 = vector.broadcast %cst_64 : f32 to vector<16x256xf32>
    %112 = arith.cmpf oge, %82, %111 : vector<16x256xf32>
    %cst_65 = arith.constant 0.000000e+00 : f32
    %113 = vector.broadcast %cst_65 : f32 to vector<16x256xf32>
    %114 = arith.subf %113, %110 : vector<16x256xf32>
    %115 = arith.select %112, %110, %114 : vector<16x256xi1>, vector<16x256xf32>
    %cst_66 = arith.constant 1.000000e+00 : f32
    %116 = vector.broadcast %cst_66 : f32 to vector<16x256xf32>
    %117 = arith.addf %116, %115 : vector<16x256xf32>
    %118 = arith.mulf %80, %117 : vector<16x256xf32>
    %119 = arith.addf %118, %1 : vector<16x256xf32>
    %120 = vector.shape_cast %119 : vector<16x256xf32> to vector<1x16x256xf32>
    %cst_67 = arith.constant dense<0.000000e+00> : vector<1xf32>
    %121 = vector.multi_reduction <add>, %120, %cst_67 [1, 2] : vector<1x16x256xf32> to vector<1xf32>
    %122 = vector.shape_cast %121 : vector<1xf32> to vector<1x1x1xf32>
    %123 = vector.extract %122[0, 0, 0] : f32 from vector<1x1x1xf32>
    %cst_68 = arith.constant 2.44140625E-4 : f32
    %124 = arith.mulf %123, %cst_68 : f32
    %125 = arith.mulf %119, %119 : vector<16x256xf32>
    %126 = vector.shape_cast %125 : vector<16x256xf32> to vector<1x16x256xf32>
    %cst_69 = arith.constant dense<0.000000e+00> : vector<1xf32>
    %127 = vector.multi_reduction <add>, %126, %cst_69 [1, 2] : vector<1x16x256xf32> to vector<1xf32>
    %128 = vector.shape_cast %127 : vector<1xf32> to vector<1x1x1xf32>
    %129 = vector.extract %128[0, 0, 0] : f32 from vector<1x1x1xf32>
    %cst_70 = arith.constant 2.44140625E-4 : f32
    %130 = arith.mulf %129, %cst_70 : f32
    %131 = arith.mulf %124, %124 : f32
    %132 = arith.subf %130, %131 : f32
    %133 = vector.broadcast %124 : f32 to vector<16x256xf32>
    %134 = arith.subf %119, %133 : vector<16x256xf32>
    %cst_71 = arith.constant 9.99999974E-6 : f32
    %135 = arith.addf %132, %cst_71 : f32
    %136 = math.rsqrt %135 : f32
    %137 = vector.broadcast %136 : f32 to vector<16x256xf32>
    %138 = arith.mulf %134, %137 : vector<16x256xf32>
    %c0_72 = arith.constant 0 : index
    %c0_73 = arith.constant 0 : index
    %139 = vector.load %arg4[%c0_72, %c0_73] : memref<16x16xf32, #tpu.memory_space<vmem>>, vector<16x16xf32>
    %cst_74 = arith.constant dense<0.000000e+00> : vector<16x256xf32>
    %140 = tpu.matmul %139, %138, %cst_74 {dimension_numbers = #tpu.dot_dimension_numbers<[1], [0], [0], [1], [0, 0, 1, 1], [], []>} : vector<16x16xf32>, vector<16x256xf32>, vector<16x256xf32> -> vector<16x256xf32>
    %c0_75 = arith.constant 0 : index
    %c0_76 = arith.constant 0 : index
    %141 = vector.load %arg6[%c0_75, %c0_76] : memref<16x1xf32, #tpu.memory_space<vmem>>, vector<16x1xf32>
    %142 = vector.broadcast %141 : vector<16x1xf32> to vector<16x256xf32>
    %143 = arith.addf %140, %142 : vector<16x256xf32>
    %cst_77 = arith.constant 5.000000e-01 : f32
    %144 = vector.broadcast %cst_77 : f32 to vector<16x256xf32>
    %145 = arith.mulf %144, %143 : vector<16x256xf32>
    %cst_78 = arith.constant 0.707106769 : f32
    %146 = vector.broadcast %cst_78 : f32 to vector<16x256xf32>
    %147 = arith.mulf %143, %146 : vector<16x256xf32>
    %148 = math.absf %147 : vector<16x256xf32>
    %cst_79 = arith.constant 0.327591091 : f32
    %149 = vector.broadcast %cst_79 : f32 to vector<16x256xf32>
    %150 = arith.mulf %149, %148 : vector<16x256xf32>
    %cst_80 = arith.constant 1.000000e+00 : f32
    %151 = vector.broadcast %cst_80 : f32 to vector<16x256xf32>
    %152 = arith.addf %151, %150 : vector<16x256xf32>
    %cst_81 = arith.constant 1.000000e+00 : f32
    %153 = vector.broadcast %cst_81 : f32 to vector<16x256xf32>
    %154 = arith.divf %153, %152 : vector<16x256xf32>
    %cst_82 = arith.constant 1.06140542 : f32
    %155 = vector.broadcast %cst_82 : f32 to vector<16x256xf32>
    %156 = arith.mulf %155, %154 : vector<16x256xf32>
    %cst_83 = arith.constant -1.45315206 : f32
    %157 = vector.broadcast %cst_83 : f32 to vector<16x256xf32>
    %158 = arith.addf %156, %157 : vector<16x256xf32>
    %159 = arith.mulf %158, %154 : vector<16x256xf32>
    %cst_84 = arith.constant 1.42141378 : f32
    %160 = vector.broadcast %cst_84 : f32 to vector<16x256xf32>
    %161 = arith.addf %159, %160 : vector<16x256xf32>
    %162 = arith.mulf %161, %154 : vector<16x256xf32>
    %cst_85 = arith.constant -0.284496725 : f32
    %163 = vector.broadcast %cst_85 : f32 to vector<16x256xf32>
    %164 = arith.addf %162, %163 : vector<16x256xf32>
    %165 = arith.mulf %164, %154 : vector<16x256xf32>
    %cst_86 = arith.constant 0.254829586 : f32
    %166 = vector.broadcast %cst_86 : f32 to vector<16x256xf32>
    %167 = arith.addf %165, %166 : vector<16x256xf32>
    %168 = arith.mulf %167, %154 : vector<16x256xf32>
    %cst_87 = arith.constant 0.000000e+00 : f32
    %169 = vector.broadcast %cst_87 : f32 to vector<16x256xf32>
    %170 = arith.subf %169, %148 : vector<16x256xf32>
    %171 = arith.mulf %170, %148 : vector<16x256xf32>
    %172 = math.exp %171 : vector<16x256xf32>
    %173 = arith.mulf %168, %172 : vector<16x256xf32>
    %cst_88 = arith.constant 1.000000e+00 : f32
    %174 = vector.broadcast %cst_88 : f32 to vector<16x256xf32>
    %175 = arith.subf %174, %173 : vector<16x256xf32>
    %cst_89 = arith.constant 0.000000e+00 : f32
    %176 = vector.broadcast %cst_89 : f32 to vector<16x256xf32>
    %177 = arith.cmpf oge, %147, %176 : vector<16x256xf32>
    %cst_90 = arith.constant 0.000000e+00 : f32
    %178 = vector.broadcast %cst_90 : f32 to vector<16x256xf32>
    %179 = arith.subf %178, %175 : vector<16x256xf32>
    %180 = arith.select %177, %175, %179 : vector<16x256xi1>, vector<16x256xf32>
    %cst_91 = arith.constant 1.000000e+00 : f32
    %181 = vector.broadcast %cst_91 : f32 to vector<16x256xf32>
    %182 = arith.addf %181, %180 : vector<16x256xf32>
    %183 = arith.mulf %145, %182 : vector<16x256xf32>
    %184 = arith.addf %183, %138 : vector<16x256xf32>
    %185 = vector.shape_cast %184 : vector<16x256xf32> to vector<1x16x256xf32>
    %cst_92 = arith.constant dense<0.000000e+00> : vector<1xf32>
    %186 = vector.multi_reduction <add>, %185, %cst_92 [1, 2] : vector<1x16x256xf32> to vector<1xf32>
    %187 = vector.shape_cast %186 : vector<1xf32> to vector<1x1x1xf32>
    %188 = vector.extract %187[0, 0, 0] : f32 from vector<1x1x1xf32>
    %cst_93 = arith.constant 2.44140625E-4 : f32
    %189 = arith.mulf %188, %cst_93 : f32
    %190 = arith.mulf %184, %184 : vector<16x256xf32>
    %191 = vector.shape_cast %190 : vector<16x256xf32> to vector<1x16x256xf32>
    %cst_94 = arith.constant dense<0.000000e+00> : vector<1xf32>
    %192 = vector.multi_reduction <add>, %191, %cst_94 [1, 2] : vector<1x16x256xf32> to vector<1xf32>
    %193 = vector.shape_cast %192 : vector<1xf32> to vector<1x1x1xf32>
    %194 = vector.extract %193[0, 0, 0] : f32 from vector<1x1x1xf32>
    %cst_95 = arith.constant 2.44140625E-4 : f32
    %195 = arith.mulf %194, %cst_95 : f32
    %196 = arith.mulf %189, %189 : f32
    %197 = arith.subf %195, %196 : f32
    %198 = vector.broadcast %189 : f32 to vector<16x256xf32>
    %199 = arith.subf %184, %198 : vector<16x256xf32>
    %cst_96 = arith.constant 9.99999974E-6 : f32
    %200 = arith.addf %197, %cst_96 : f32
    %201 = math.rsqrt %200 : f32
    %202 = vector.broadcast %201 : f32 to vector<16x256xf32>
    %203 = arith.mulf %199, %202 : vector<16x256xf32>
    %c0_97 = arith.constant 0 : index
    %c0_98 = arith.constant 0 : index
    %204 = vector.load %arg11[%c0_97, %c0_98] : memref<16x256xf32, #tpu.memory_space<vmem>>, vector<16x256xf32>
    tpu.vector_store %arg11[%c0_97, %c0_98], %203 {strides = array<i32>} : memref<16x256xf32, #tpu.memory_space<vmem>>, vector<16x256xf32>,
    %c0_99 = arith.constant 0 : index
    %c0_100 = arith.constant 0 : index
    %205 = vector.load %arg10[%c0_99, %c0_100] : memref<256x16xf32, #tpu.memory_space<vmem>>, vector<256x16xf32>
    %cst_101 = arith.constant dense<0.000000e+00> : vector<16x16xf32>
    %206 = tpu.matmul %203, %205, %cst_101 {dimension_numbers = #tpu.dot_dimension_numbers<[1], [0], [0], [1], [0, 0, 1, 1], [], []>} : vector<16x256xf32>, vector<256x16xf32>, vector<16x16xf32> -> vector<16x16xf32>
    %c0_102 = arith.constant 0 : index
    %c0_103 = arith.constant 0 : index
    %207 = vector.load %arg12[%c0_102, %c0_103] : memref<16x16xf32, #tpu.memory_space<vmem>>, vector<16x16xf32>
    tpu.vector_store %arg12[%c0_102, %c0_103], %206 {strides = array<i32>} : memref<16x16xf32, #tpu.memory_space<vmem>>, vector<16x16xf32>,
    return
  }
}

</mosaic_0001>

<llo_original>
// kernel: tpu_custom_call.1
$region0: #{tpu_custom_call.1}
  #allocation0 [shape = 'u32[]', space=smem, size = 0x4, offset = 0x4, fixed_abs, tag = 'smem constant byte address 0x4 - core index']
  #allocation1 [shape = 'u32[144,128]{1,0:T(1,128)}', space=vmem, size = 0x12000, scoped, tag = 'internal scratch']
  %s0 = inlined_call_operand.vmem [shape: f32[4,64], index: 0, kind: input, shape index: {}]
  %s1 = inlined_call_operand.vmem [shape: f32[16,256], index: 1, kind: input, shape index: {}]
  %s2 = inlined_call_operand.vmem [shape: f32[3,64,64], index: 2, kind: input, shape index: {}]
  %s3 = inlined_call_operand.vmem [shape: f32[3,16,16], index: 3, kind: input, shape index: {}]
  %s4 = inlined_call_operand.vmem [shape: f32[16,16], index: 4, kind: input, shape index: {}]
  %s5 = inlined_call_operand.vmem [shape: f32[16,1], index: 5, kind: input, shape index: {}]
  %s6 = inlined_call_operand.vmem [shape: f32[16,1], index: 6, kind: input, shape index: {}]
  %s7 = inlined_call_operand.vmem [shape: f32[16,4], index: 7, kind: input, shape index: {}]
  %s8 = inlined_call_operand.vmem [shape: f32[4,16], index: 8, kind: input, shape index: {}]
  %s9 = inlined_call_operand.vmem [shape: f32[16,16], index: 9, kind: input, shape index: {}]
  %s10 = inlined_call_operand.vmem [shape: f32[256,16], index: 10, kind: input, shape index: {}]
  %s11 = inlined_call_operand.hbm [shape: f32[16,256], index: 11, kind: output, shape index: {0}]
  %s12 = inlined_call_operand.hbm [shape: f32[16,16], index: 12, kind: output, shape index: {1}]
  %13 = xla_tuple %s11, %s12
  %s14 = sld [smem:[#allocation0]]
  $region62: #{tpu_custom_call.1} parent=0
    _
  %s16 = ssub.s32 1, %s14
  %s17 = scalar_select 0, %s16, %s14
  $region1: #{tpu_custom_call.1} parent=0
    #allocation2 [shape = 'u8[16384]{0}', space=vmem, size = 0x4000, scoped, tag = 'output window, operand 0, single buffered']
    #allocation3 [shape = 's32[1]{0}', space=sflag, size = 0x4, scoped, tag = 'scoped memory for tpu_custom_call.1']
    #allocation4 [shape = 'u8[8192]{0}', space=vmem, size = 0x2000, scoped, tag = 'output window, operand 1, single buffered']
    #allocation5 [shape = 's32[1]{0}', space=sflag, size = 0x4, scoped, tag = 'scoped memory for tpu_custom_call.1']
    %18 = vsyncpa [#allocation3], 0
    %19 = vsyncpa [#allocation5], 0
    // Predicated region
    $region2: #{tpu_custom_call.1} parent=1 // pred_check
      _
    $region3: #{tpu_custom_call.1} parent=1 // pred_check_branch
      %21 = sbr.rel (0) target = $region5
    $region4: #{tpu_custom_call.1} parent=1 // pred_region
      _
    $region5: #{tpu_custom_call.1} parent=1 // pred_fallthru
      _
    // Predicated region
    $region6: #{tpu_custom_call.1} parent=1 // pred_check
      _
    $region7: #{tpu_custom_call.1} parent=1 // pred_check_branch
      %23 = sbr.rel (0) target = $region9
    $region8: #{tpu_custom_call.1} parent=1 // pred_region
      _
    $region9: #{tpu_custom_call.1} parent=1 // pred_fallthru
      _
    // Predicated region
    $region10: #{tpu_custom_call.1} parent=1 // pred_check
      _
    $region11: #{tpu_custom_call.1} parent=1 // pred_check_branch
      %25 = sbr.rel (0) target = $region13
    $region12: #{tpu_custom_call.1} parent=1 // pred_region
      _
    $region13: #{tpu_custom_call.1} parent=1 // pred_fallthru
      _
    // Predicated region
    $region14: #{tpu_custom_call.1} parent=1 // pred_check
      _
    $region15: #{tpu_custom_call.1} parent=1 // pred_check_branch
      %27 = sbr.rel (0) target = $region17
    $region16: #{tpu_custom_call.1} parent=1 // pred_region
      _
    $region17: #{tpu_custom_call.1} parent=1 // pred_fallthru
      _
    // Predicated region
    $region18: #{tpu_custom_call.1} parent=1 // pred_check
      _
    $region19: #{tpu_custom_call.1} parent=1 // pred_check_branch
      %29 = sbr.rel (0) target = $region21
    $region20: #{tpu_custom_call.1} parent=1 // pred_region
      _
    $region21: #{tpu_custom_call.1} parent=1 // pred_fallthru
      _
    // Predicated region
    $region22: #{tpu_custom_call.1} parent=1 // pred_check
      _
    $region23: #{tpu_custom_call.1} parent=1 // pred_check_branch
      %31 = sbr.rel (0) target = $region25
    $region24: #{tpu_custom_call.1} parent=1 // pred_region
      _
    $region25: #{tpu_custom_call.1} parent=1 // pred_fallthru
      _
    // Predicated region
    $region26: #{tpu_custom_call.1} parent=1 // pred_check
      _
    $region27: #{tpu_custom_call.1} parent=1 // pred_check_branch
      %33 = sbr.rel (0) target = $region29
    $region28: #{tpu_custom_call.1} parent=1 // pred_region
      _
    $region29: #{tpu_custom_call.1} parent=1 // pred_fallthru
      _
    // Predicated region
    $region30: #{tpu_custom_call.1} parent=1 // pred_check
      _
    $region31: #{tpu_custom_call.1} parent=1 // pred_check_branch
      %35 = sbr.rel (0) target = $region33
    $region32: #{tpu_custom_call.1} parent=1 // pred_region
      _
    $region33: #{tpu_custom_call.1} parent=1 // pred_fallthru
      _
    // Predicated region
    $region34: #{tpu_custom_call.1} parent=1 // pred_check
      _
    $region35: #{tpu_custom_call.1} parent=1 // pred_check_branch
      %37 = sbr.rel (0) target = $region37
    $region36: #{tpu_custom_call.1} parent=1 // pred_region
      _
    $region37: #{tpu_custom_call.1} parent=1 // pred_fallthru
      _
    // Predicated region
    $region38: #{tpu_custom_call.1} parent=1 // pred_check
      _
    $region39: #{tpu_custom_call.1} parent=1 // pred_check_branch
      %39 = sbr.rel (0) target = $region41
    $region40: #{tpu_custom_call.1} parent=1 // pred_region
      _
    $region41: #{tpu_custom_call.1} parent=1 // pred_fallthru
      _
    // Predicated region
    $region42: #{tpu_custom_call.1} parent=1 // pred_check
      _
    $region43: #{tpu_custom_call.1} parent=1 // pred_check_branch
      %41 = sbr.rel (0) target = $region45
    $region44: #{tpu_custom_call.1} parent=1 // pred_region
      _
    $region45: #{tpu_custom_call.1} parent=1 // pred_fallthru
      _
    %v42 = vld [vmem:[%s0] sm:$0xf]
    %v43 = vld [vmem:[%s1] sm:$0xff]
    %v44 = vld [vmem:[%s1 + $0x8] sm:$0xff]
    %v45 = vld [vmem:[%s1 + $0x10] sm:$0xff]
    %v46 = vld [vmem:[%s1 + $0x18] sm:$0xff]
    %v47 = vld [vmem:[%s7] sm:$0xff]
    %v48 = vld [vmem:[%s7 + $0x8] sm:$0xff]
    %v49 = vld [vmem:[%s8] sm:$0xf]
    %v50 = vld [vmem:[%s9] sm:$0xff]
    %v51 = vld [vmem:[%s9 + $0x8] sm:$0xff]
    %v52 = vld [vmem:[%s2] sm:$0xff]
    %v53 = vld [vmem:[%s2 + $0x8] sm:$0xff]
    %v54 = vld [vmem:[%s2 + $0x10] sm:$0xff]
    %v55 = vld [vmem:[%s2 + $0x18] sm:$0xff]
    %v56 = vld [vmem:[%s2 + $0x20] sm:$0xff]
    %v57 = vld [vmem:[%s2 + $0x28] sm:$0xff]
    %v58 = vld [vmem:[%s2 + $0x30] sm:$0xff]
    %v59 = vld [vmem:[%s2 + $0x38] sm:$0xff]
    %vm60 = vcmask 523264
    %v62 = vsel %vm60, %v42, 0
    %64 = vmatprep.subr.mxu0 0.0
    %65 = vmatpush1.msra.mxu0 0.0
    %66 = vmatprep.subr.mxu0 0.0
    %67 = vmatpush1.msra.mxu0 0.0
    %68 = vmatprep.subr.mxu0 0.0
    %69 = vmatpush1.msra.mxu0 0.0
    %70 = vmatprep.subr.mxu0 0.0
    %71 = vmatpush1.msra.mxu0 0.0
    %72 = vmatprep.subr.mxu0 0.0
    %73 = vmatpush1.msra.mxu0 0.0
    %74 = vmatprep.subr.mxu0 0.0
    %75 = vmatpush1.msra.mxu0 0.0
    %76 = vmatprep.subr.mxu0 0.0
    %77 = vmatpush1.msra.mxu0 0.0
    %78 = vmatprep.subr.mxu0 0.0
    %79 = vmatpush1.msra.mxu0 0.0
    %80 = vmatprep.subr.mxu0 0.0
    %81 = vmatpush1.msra.mxu0 %v59
    %82 = vmatprep.subr.mxu0 0.0
    %83 = vmatpush1.msra.mxu0 %v58
    %84 = vmatprep.subr.mxu0 0.0
    %85 = vmatpush1.msra.mxu0 %v57
    %86 = vmatprep.subr.mxu0 0.0
    %87 = vmatpush1.msra.mxu0 %v56
    %88 = vmatprep.subr.mxu0 0.0
    %89 = vmatpush1.msra.mxu0 %v55
    %90 = vmatprep.subr.mxu0 0.0
    %91 = vmatpush1.msra.mxu0 %v54
    %92 = vmatprep.subr.mxu0 0.0
    %93 = vmatpush1.msra.mxu0 %v53
    %94 = vmatprep.subr.mxu0 0.0
    %95 = vmatpush1.msra.mxu0 %v52
    %96 = vmatprep.subr.mxu0 0.0
    %97 = vmatpush2.msra.mxu0 0.0
    %98 = vmatprep.subr.mxu0 0.0
    %99 = vmatpush2.msra.mxu0 0.0
    %100 = vmatprep.subr.mxu0 0.0
    %101 = vmatpush2.msra.mxu0 0.0
    %102 = vmatprep.subr.mxu0 0.0
    %103 = vmatpush2.msra.mxu0 0.0
    %104 = vmatprep.subr.mxu0 0.0
    %105 = vmatpush2.msra.mxu0 0.0
    %106 = vmatprep.subr.mxu0 0.0
    %107 = vmatpush2.msra.mxu0 0.0
    %108 = vmatprep.subr.mxu0 0.0
    %109 = vmatpush2.msra.mxu0 0.0
    %110 = vmatprep.subr.mxu0 0.0
    %111 = vmatpush2.msra.mxu0 0.0
    %112 = vmatprep.subr.mxu0 0.0
    %113 = vmatpush2.msra.mxu0 0.0
    %114 = vmatprep.subr.mxu0 0.0
    %115 = vmatpush2.msra.mxu0 0.0
    %116 = vmatprep.subr.mxu0 0.0
    %117 = vmatpush2.msra.mxu0 0.0
    %118 = vmatprep.subr.mxu0 0.0
    %119 = vmatpush2.msra.mxu0 0.0
    %120 = vmatprep.subr.mxu0 0.0
    %121 = vmatpush2.msra.mxu0 0.0
    %122 = vmatprep.subr.mxu0 0.0
    %123 = vmatpush2.msra.mxu0 0.0
    %124 = vmatprep.subr.mxu0 0.0
    %125 = vmatpush2.msra.mxu0 0.0
    %126 = vmatprep.subr.mxu0 0.0
    %127 = vmatpush2.msra.mxu0 0.0
    %128 = vmatprep.mubr.f32.mxu0 0.0
    %129 = vmatmul.mubr.f32.gmra.mxu0 %v62
    %v130 = vpop.f32.mrf.mxu0
    %v131 = vadd.f32 0.0, %v130
    %v132 = vpop.f32.mrf.mxu0
    %133 = vdwg.mxu0
    %v135 = vsel %vm60, %v131, 0
    %137 = vmatprep.subr.mxu0 0.0
    %138 = vmatpush1.xpose.msra.mxu0 0.0
    %139 = vmatprep.subr.mxu0 0.0
    %140 = vmatpush1.xpose.msra.mxu0 0.0
    %141 = vmatprep.subr.mxu0 0.0
    %142 = vmatpush1.xpose.msra.mxu0 0.0
    %143 = vmatprep.subr.mxu0 0.0
    %144 = vmatpush1.xpose.msra.mxu0 0.0
    %145 = vmatprep.subr.mxu0 0.0
    %146 = vmatpush1.xpose.msra.mxu0 0.0
    %147 = vmatprep.subr.mxu0 0.0
    %148 = vmatpush1.xpose.msra.mxu0 0.0
    %149 = vmatprep.subr.mxu0 0.0
    %150 = vmatpush1.xpose.msra.mxu0 0.0
    %151 = vmatprep.subr.mxu0 0.0
    %152 = vmatpush1.xpose.msra.mxu0 0.0
    %153 = vmatprep.subr.mxu0 0.0
    %154 = vmatpush1.xpose.msra.mxu0 0.0
    %155 = vmatprep.subr.mxu0 0.0
    %156 = vmatpush1.xpose.msra.mxu0 0.0
    %157 = vmatprep.subr.mxu0 0.0
    %158 = vmatpush1.xpose.msra.mxu0 0.0
    %159 = vmatprep.subr.mxu0 0.0
    %160 = vmatpush1.xpose.msra.mxu0 0.0
    %161 = vmatprep.subr.mxu0 0.0
    %162 = vmatpush1.xpose.msra.mxu0 0.0
    %163 = vmatprep.subr.mxu0 0.0
    %164 = vmatpush1.xpose.msra.mxu0 0.0
    %165 = vmatprep.subr.mxu0 0.0
    %166 = vmatpush1.xpose.msra.mxu0 0.0
    %167 = vmatprep.subr.mxu0 0.0
    %168 = vmatpush1.xpose.msra.mxu0 %v62
    %169 = vmatprep.subr.mxu0 0.0
    %170 = vmatpush2.xpose.msra.mxu0 0.0
    %171 = vmatprep.subr.mxu0 0.0
    %172 = vmatpush2.xpose.msra.mxu0 0.0
    %173 = vmatprep.subr.mxu0 0.0
    %174 = vmatpush2.xpose.msra.mxu0 0.0
    %175 = vmatprep.subr.mxu0 0.0
    %176 = vmatpush2.xpose.msra.mxu0 0.0
    %177 = vmatprep.subr.mxu0 0.0
    %178 = vmatpush2.xpose.msra.mxu0 0.0
    %179 = vmatprep.subr.mxu0 0.0
    %180 = vmatpush2.xpose.msra.mxu0 0.0
    %181 = vmatprep.subr.mxu0 0.0
    %182 = vmatpush2.xpose.msra.mxu0 0.0
    %183 = vmatprep.subr.mxu0 0.0
    %184 = vmatpush2.xpose.msra.mxu0 0.0
    %185 = vmatprep.subr.mxu0 0.0
    %186 = vmatpush2.xpose.msra.mxu0 0.0
    %187 = vmatprep.subr.mxu0 0.0
    %188 = vmatpush2.xpose.msra.mxu0 0.0
    %189 = vmatprep.subr.mxu0 0.0
    %190 = vmatpush2.xpose.msra.mxu0 0.0
    %191 = vmatprep.subr.mxu0 0.0
    %192 = vmatpush2.xpose.msra.mxu0 0.0
    %193 = vmatprep.subr.mxu0 0.0
    %194 = vmatpush2.xpose.msra.mxu0 0.0
    %195 = vmatprep.subr.mxu0 0.0
    %196 = vmatpush2.xpose.msra.mxu0 0.0
    %197 = vmatprep.subr.mxu0 0.0
    %198 = vmatpush2.xpose.msra.mxu0 0.0
    %199 = vmatprep.subr.mxu0 0.0
    %200 = vmatpush2.xpose.msra.mxu0 0.0
    %201 = vmatprep.mubr.f32.mxu0 0.0
    %202 = vmatmul.mubr.f32.gmra.mxu0 %v135
    %v203 = vpop.f32.mrf.mxu0
    %v204 = vadd.f32 0.0, %v203
    %v205 = vpop.f32.mrf.mxu0
    %206 = vdwg.mxu0
    %v207 = vmul.f32 %v204, 0.125
    %vm208 = vcmask 27648
    %v209 = vsel %vm208, %v207, -inf
    %210 = vmax.xlane.f32.xlu0 %v209
    %v211 = vpop.xlane.xlu0 %210
    %v212 = vsub.f32 %v207, %v211
    %v213 = vmul.f32 %v212, 1.442695
    %v214 = vpow.pop %v213
    %v215 = vsel %vm208, %v214, 0.0
    %216 = vadd.xlane.f32.xlu0 %v215
    %v217 = vpop.xlane.xlu0 %216
    %v218 = vrcp.pop %v217
    %v219 = vmul.f32 %v214, %v218
    %vm220 = vcmask 31744
    %v222 = vsel %vm220, %v47, 0
    %v225 = vsel %vm220, %v48, 0
    %vm227 = vcmask 1043456
    %v229 = vsel %vm227, %v219, 0
    %231 = vmatprep.subr.mxu0 0.0
    %232 = vmatpush1.msra.mxu0 0.0
    %233 = vmatprep.subr.mxu0 0.0
    %234 = vmatpush1.msra.mxu0 0.0
    %235 = vmatprep.subr.mxu0 0.0
    %236 = vmatpush1.msra.mxu0 0.0
    %237 = vmatprep.subr.mxu0 0.0
    %238 = vmatpush1.msra.mxu0 0.0
    %239 = vmatprep.subr.mxu0 0.0
    %240 = vmatpush1.msra.mxu0 0.0
    %241 = vmatprep.subr.mxu0 0.0
    %242 = vmatpush1.msra.mxu0 0.0
    %243 = vmatprep.subr.mxu0 0.0
    %244 = vmatpush1.msra.mxu0 0.0
    %245 = vmatprep.subr.mxu0 0.0
    %246 = vmatpush1.msra.mxu0 0.0
    %247 = vmatprep.subr.mxu0 0.0
    %248 = vmatpush1.msra.mxu0 0.0
    %249 = vmatprep.subr.mxu0 0.0
    %250 = vmatpush1.msra.mxu0 0.0
    %251 = vmatprep.subr.mxu0 0.0
    %252 = vmatpush1.msra.mxu0 0.0
    %253 = vmatprep.subr.mxu0 0.0
    %254 = vmatpush1.msra.mxu0 0.0
    %255 = vmatprep.subr.mxu0 0.0
    %256 = vmatpush1.msra.mxu0 0.0
    %257 = vmatprep.subr.mxu0 0.0
    %258 = vmatpush1.msra.mxu0 0.0
    %259 = vmatprep.subr.mxu0 0.0
    %260 = vmatpush1.msra.mxu0 0.0
    %261 = vmatprep.subr.mxu0 0.0
    %262 = vmatpush1.msra.mxu0 %v229
    %263 = vmatprep.subr.mxu0 0.0
    %264 = vmatpush2.msra.mxu0 0.0
    %265 = vmatprep.subr.mxu0 0.0
    %266 = vmatpush2.msra.mxu0 0.0
    %267 = vmatprep.subr.mxu0 0.0
    %268 = vmatpush2.msra.mxu0 0.0
    %269 = vmatprep.subr.mxu0 0.0
    %270 = vmatpush2.msra.mxu0 0.0
    %271 = vmatprep.subr.mxu0 0.0
    %272 = vmatpush2.msra.mxu0 0.0
    %273 = vmatprep.subr.mxu0 0.0
    %274 = vmatpush2.msra.mxu0 0.0
    %275 = vmatprep.subr.mxu0 0.0
    %276 = vmatpush2.msra.mxu0 0.0
    %277 = vmatprep.subr.mxu0 0.0
    %278 = vmatpush2.msra.mxu0 0.0
    %279 = vmatprep.subr.mxu0 0.0
    %280 = vmatpush2.msra.mxu0 0.0
    %281 = vmatprep.subr.mxu0 0.0
    %282 = vmatpush2.msra.mxu0 0.0
    %283 = vmatprep.subr.mxu0 0.0
    %284 = vmatpush2.msra.mxu0 0.0
    %285 = vmatprep.subr.mxu0 0.0
    %286 = vmatpush2.msra.mxu0 0.0
    %287 = vmatprep.subr.mxu0 0.0
    %288 = vmatpush2.msra.mxu0 0.0
    %289 = vmatprep.subr.mxu0 0.0
    %290 = vmatpush2.msra.mxu0 0.0
    %291 = vmatprep.subr.mxu0 0.0
    %292 = vmatpush2.msra.mxu0 0.0
    %293 = vmatprep.subr.mxu0 0.0
    %294 = vmatpush2.msra.mxu0 0.0
    %295 = vmatprep.mubr.f32.mxu0 0.0
    %296 = vmatmul.mubr.f32.gmra.mxu0 %v222
    %v297 = vpop.f32.mrf.mxu0
    %v298 = vadd.f32 0.0, %v297
    %v299 = vpop.f32.mrf.mxu0
    %300 = vmatprep.mubr.f32.mxu0 0.0
    %301 = vmatmul.mubr.f32.gmra.mxu0 %v225
    %v302 = vpop.f32.mrf.mxu0
    %v303 = vadd.f32 0.0, %v302
    %v304 = vpop.f32.mrf.mxu0
    %305 = vdwg.mxu0
    %v307 = vsel %vm220, %v298, 0
    %v310 = vsel %vm220, %v303, 0
    %v313 = vsel %vm227, %v49, 0
    %315 = vmatprep.subr.mxu0 0.0
    %316 = vmatpush1.msra.mxu0 0.0
    %317 = vmatprep.subr.mxu0 0.0
    %318 = vmatpush1.msra.mxu0 0.0
    %319 = vmatprep.subr.mxu0 0.0
    %320 = vmatpush1.msra.mxu0 0.0
    %321 = vmatprep.subr.mxu0 0.0
    %322 = vmatpush1.msra.mxu0 0.0
    %323 = vmatprep.subr.mxu0 0.0
    %324 = vmatpush1.msra.mxu0 0.0
    %325 = vmatprep.subr.mxu0 0.0
    %326 = vmatpush1.msra.mxu0 0.0
    %327 = vmatprep.subr.mxu0 0.0
    %328 = vmatpush1.msra.mxu0 0.0
    %329 = vmatprep.subr.mxu0 0.0
    %330 = vmatpush1.msra.mxu0 0.0
    %331 = vmatprep.subr.mxu0 0.0
    %332 = vmatpush1.msra.mxu0 0.0
    %333 = vmatprep.subr.mxu0 0.0
    %334 = vmatpush1.msra.mxu0 0.0
    %335 = vmatprep.subr.mxu0 0.0
    %336 = vmatpush1.msra.mxu0 0.0
    %337 = vmatprep.subr.mxu0 0.0
    %338 = vmatpush1.msra.mxu0 0.0
    %339 = vmatprep.subr.mxu0 0.0
    %340 = vmatpush1.msra.mxu0 0.0
    %341 = vmatprep.subr.mxu0 0.0
    %342 = vmatpush1.msra.mxu0 0.0
    %343 = vmatprep.subr.mxu0 0.0
    %344 = vmatpush1.msra.mxu0 0.0
    %345 = vmatprep.subr.mxu0 0.0
    %346 = vmatpush1.msra.mxu0 %v313
    %347 = vmatprep.subr.mxu0 0.0
    %348 = vmatpush2.msra.mxu0 0.0
    %349 = vmatprep.subr.mxu0 0.0
    %350 = vmatpush2.msra.mxu0 0.0
    %351 = vmatprep.subr.mxu0 0.0
    %352 = vmatpush2.msra.mxu0 0.0
    %353 = vmatprep.subr.mxu0 0.0
    %354 = vmatpush2.msra.mxu0 0.0
    %355 = vmatprep.subr.mxu0 0.0
    %356 = vmatpush2.msra.mxu0 0.0
    %357 = vmatprep.subr.mxu0 0.0
    %358 = vmatpush2.msra.mxu0 0.0
    %359 = vmatprep.subr.mxu0 0.0
    %360 = vmatpush2.msra.mxu0 0.0
    %361 = vmatprep.subr.mxu0 0.0
    %362 = vmatpush2.msra.mxu0 0.0
    %363 = vmatprep.subr.mxu0 0.0
    %364 = vmatpush2.msra.mxu0 0.0
    %365 = vmatprep.subr.mxu0 0.0
    %366 = vmatpush2.msra.mxu0 0.0
    %367 = vmatprep.subr.mxu0 0.0
    %368 = vmatpush2.msra.mxu0 0.0
    %369 = vmatprep.subr.mxu0 0.0
    %370 = vmatpush2.msra.mxu0 0.0
    %371 = vmatprep.subr.mxu0 0.0
    %372 = vmatpush2.msra.mxu0 0.0
    %373 = vmatprep.subr.mxu0 0.0
    %374 = vmatpush2.msra.mxu0 0.0
    %375 = vmatprep.subr.mxu0 0.0
    %376 = vmatpush2.msra.mxu0 0.0
    %377 = vmatprep.subr.mxu0 0.0
    %378 = vmatpush2.msra.mxu0 0.0
    %379 = vmatprep.mubr.f32.mxu0 0.0
    %380 = vmatmul.mubr.f32.gmra.mxu0 %v307
    %v381 = vpop.f32.mrf.mxu0
    %v382 = vadd.f32 0.0, %v381
    %v383 = vpop.f32.mrf.mxu0
    %384 = vmatprep.mubr.f32.mxu0 0.0
    %385 = vmatmul.mubr.f32.gmra.mxu0 %v310
    %v386 = vpop.f32.mrf.mxu0
    %v387 = vadd.f32 0.0, %v386
    %v388 = vpop.f32.mrf.mxu0
    %389 = vdwg.mxu0
    %v390 = vmul.f32 %v382, %v50
    %v391 = vmul.f32 %v387, %v51
    %v392 = vld [vmem:[%s3] sm:$0xff]
    %v393 = vld [vmem:[%s3 + $0x8] sm:$0xff]
    %s394 = scalar_lea.vmem %s2, 64
    %v395 = vld [vmem:[%s394] sm:$0xff]
    %v396 = vld [vmem:[%s394 + $0x8] sm:$0xff]
    %v397 = vld [vmem:[%s394 + $0x10] sm:$0xff]
    %v398 = vld [vmem:[%s394 + $0x18] sm:$0xff]
    %v399 = vld [vmem:[%s394 + $0x20] sm:$0xff]
    %v400 = vld [vmem:[%s394 + $0x28] sm:$0xff]
    %v401 = vld [vmem:[%s394 + $0x30] sm:$0xff]
    %v402 = vld [vmem:[%s394 + $0x38] sm:$0xff]
    %403 = vmatprep.subr.mxu0 0.0
    %404 = vmatpush1.msra.mxu0 0.0
    %405 = vmatprep.subr.mxu0 0.0
    %406 = vmatpush1.msra.mxu0 0.0
    %407 = vmatprep.subr.mxu0 0.0
    %408 = vmatpush1.msra.mxu0 0.0
    %409 = vmatprep.subr.mxu0 0.0
    %410 = vmatpush1.msra.mxu0 0.0
    %411 = vmatprep.subr.mxu0 0.0
    %412 = vmatpush1.msra.mxu0 0.0
    %413 = vmatprep.subr.mxu0 0.0
    %414 = vmatpush1.msra.mxu0 0.0
    %415 = vmatprep.subr.mxu0 0.0
    %416 = vmatpush1.msra.mxu0 0.0
    %417 = vmatprep.subr.mxu0 0.0
    %418 = vmatpush1.msra.mxu0 0.0
    %419 = vmatprep.subr.mxu0 0.0
    %420 = vmatpush1.msra.mxu0 %v402
    %421 = vmatprep.subr.mxu0 0.0
    %422 = vmatpush1.msra.mxu0 %v401
    %423 = vmatprep.subr.mxu0 0.0
    %424 = vmatpush1.msra.mxu0 %v400
    %425 = vmatprep.subr.mxu0 0.0
    %426 = vmatpush1.msra.mxu0 %v399
    %427 = vmatprep.subr.mxu0 0.0
    %428 = vmatpush1.msra.mxu0 %v398
    %429 = vmatprep.subr.mxu0 0.0
    %430 = vmatpush1.msra.mxu0 %v397
    %431 = vmatprep.subr.mxu0 0.0
    %432 = vmatpush1.msra.mxu0 %v396
    %433 = vmatprep.subr.mxu0 0.0
    %434 = vmatpush1.msra.mxu0 %v395
    %435 = vmatprep.subr.mxu0 0.0
    %436 = vmatpush2.msra.mxu0 0.0
    %437 = vmatprep.subr.mxu0 0.0
    %438 = vmatpush2.msra.mxu0 0.0
    %439 = vmatprep.subr.mxu0 0.0
    %440 = vmatpush2.msra.mxu0 0.0
    %441 = vmatprep.subr.mxu0 0.0
    %442 = vmatpush2.msra.mxu0 0.0
    %443 = vmatprep.subr.mxu0 0.0
    %444 = vmatpush2.msra.mxu0 0.0
    %445 = vmatprep.subr.mxu0 0.0
    %446 = vmatpush2.msra.mxu0 0.0
    %447 = vmatprep.subr.mxu0 0.0
    %448 = vmatpush2.msra.mxu0 0.0
    %449 = vmatprep.subr.mxu0 0.0
    %450 = vmatpush2.msra.mxu0 0.0
    %451 = vmatprep.subr.mxu0 0.0
    %452 = vmatpush2.msra.mxu0 0.0
    %453 = vmatprep.subr.mxu0 0.0
    %454 = vmatpush2.msra.mxu0 0.0
    %455 = vmatprep.subr.mxu0 0.0
    %456 = vmatpush2.msra.mxu0 0.0
    %457 = vmatprep.subr.mxu0 0.0
    %458 = vmatpush2.msra.mxu0 0.0
    %459 = vmatprep.subr.mxu0 0.0
    %460 = vmatpush2.msra.mxu0 0.0
    %461 = vmatprep.subr.mxu0 0.0
    %462 = vmatpush2.msra.mxu0 0.0
    %463 = vmatprep.subr.mxu0 0.0
    %464 = vmatpush2.msra.mxu0 0.0
    %465 = vmatprep.subr.mxu0 0.0
    %466 = vmatpush2.msra.mxu0 0.0
    %467 = vmatprep.mubr.f32.mxu0 0.0
    %468 = vmatmul.mubr.f32.gmra.mxu0 %v62
    %v469 = vpop.f32.mrf.mxu0
    %v470 = vadd.f32 0.0, %v469
    %v471 = vpop.f32.mrf.mxu0
    %472 = vdwg.mxu0
    %v474 = vsel %vm60, %v470, 0
    %476 = vmatprep.subr.mxu0 0.0
    %477 = vmatpush1.xpose.msra.mxu0 0.0
    %478 = vmatprep.subr.mxu0 0.0
    %479 = vmatpush1.xpose.msra.mxu0 0.0
    %480 = vmatprep.subr.mxu0 0.0
    %481 = vmatpush1.xpose.msra.mxu0 0.0
    %482 = vmatprep.subr.mxu0 0.0
    %483 = vmatpush1.xpose.msra.mxu0 0.0
    %484 = vmatprep.subr.mxu0 0.0
    %485 = vmatpush1.xpose.msra.mxu0 0.0
    %486 = vmatprep.subr.mxu0 0.0
    %487 = vmatpush1.xpose.msra.mxu0 0.0
    %488 = vmatprep.subr.mxu0 0.0
    %489 = vmatpush1.xpose.msra.mxu0 0.0
    %490 = vmatprep.subr.mxu0 0.0
    %491 = vmatpush1.xpose.msra.mxu0 0.0
    %492 = vmatprep.subr.mxu0 0.0
    %493 = vmatpush1.xpose.msra.mxu0 0.0
    %494 = vmatprep.subr.mxu0 0.0
    %495 = vmatpush1.xpose.msra.mxu0 0.0
    %496 = vmatprep.subr.mxu0 0.0
    %497 = vmatpush1.xpose.msra.mxu0 0.0
    %498 = vmatprep.subr.mxu0 0.0
    %499 = vmatpush1.xpose.msra.mxu0 0.0
    %500 = vmatprep.subr.mxu0 0.0
    %501 = vmatpush1.xpose.msra.mxu0 0.0
    %502 = vmatprep.subr.mxu0 0.0
    %503 = vmatpush1.xpose.msra.mxu0 0.0
    %504 = vmatprep.subr.mxu0 0.0
    %505 = vmatpush1.xpose.msra.mxu0 0.0
    %506 = vmatprep.subr.mxu0 0.0
    %507 = vmatpush1.xpose.msra.mxu0 %v62
    %508 = vmatprep.subr.mxu0 0.0
    %509 = vmatpush2.xpose.msra.mxu0 0.0
    %510 = vmatprep.subr.mxu0 0.0
    %511 = vmatpush2.xpose.msra.mxu0 0.0
    %512 = vmatprep.subr.mxu0 0.0
    %513 = vmatpush2.xpose.msra.mxu0 0.0
    %514 = vmatprep.subr.mxu0 0.0
    %515 = vmatpush2.xpose.msra.mxu0 0.0
    %516 = vmatprep.subr.mxu0 0.0
    %517 = vmatpush2.xpose.msra.mxu0 0.0
    %518 = vmatprep.subr.mxu0 0.0
    %519 = vmatpush2.xpose.msra.mxu0 0.0
    %520 = vmatprep.subr.mxu0 0.0
    %521 = vmatpush2.xpose.msra.mxu0 0.0
    %522 = vmatprep.subr.mxu0 0.0
    %523 = vmatpush2.xpose.msra.mxu0 0.0
    %524 = vmatprep.subr.mxu0 0.0
    %525 = vmatpush2.xpose.msra.mxu0 0.0
    %526 = vmatprep.subr.mxu0 0.0
    %527 = vmatpush2.xpose.msra.mxu0 0.0
    %528 = vmatprep.subr.mxu0 0.0
    %529 = vmatpush2.xpose.msra.mxu0 0.0
    %530 = vmatprep.subr.mxu0 0.0
    %531 = vmatpush2.xpose.msra.mxu0 0.0
    %532 = vmatprep.subr.mxu0 0.0
    %533 = vmatpush2.xpose.msra.mxu0 0.0
    %534 = vmatprep.subr.mxu0 0.0
    %535 = vmatpush2.xpose.msra.mxu0 0.0
    %536 = vmatprep.subr.mxu0 0.0
    %537 = vmatpush2.xpose.msra.mxu0 0.0
    %538 = vmatprep.subr.mxu0 0.0
    %539 = vmatpush2.xpose.msra.mxu0 0.0
    %540 = vmatprep.mubr.f32.mxu0 0.0
    %541 = vmatmul.mubr.f32.gmra.mxu0 %v474
    %v542 = vpop.f32.mrf.mxu0
    %v543 = vadd.f32 0.0, %v542
    %v544 = vpop.f32.mrf.mxu0
    %545 = vdwg.mxu0
    %v546 = vmul.f32 %v543, 0.125
    %v547 = vsel %vm208, %v546, -inf
    %548 = vmax.xlane.f32.xlu0 %v547
    %v549 = vpop.xlane.xlu0 %548
    %v550 = vsub.f32 %v546, %v549
    %v551 = vmul.f32 %v550, 1.442695
    %v552 = vpow.pop %v551
    %v553 = vsel %vm208, %v552, 0.0
    %554 = vadd.xlane.f32.xlu0 %v553
    %v555 = vpop.xlane.xlu0 %554
    %v556 = vrcp.pop %v555
    %v557 = vmul.f32 %v552, %v556
    %v559 = vsel %vm227, %v557, 0
    %561 = vmatprep.subr.mxu0 0.0
    %562 = vmatpush1.msra.mxu0 0.0
    %563 = vmatprep.subr.mxu0 0.0
    %564 = vmatpush1.msra.mxu0 0.0
    %565 = vmatprep.subr.mxu0 0.0
    %566 = vmatpush1.msra.mxu0 0.0
    %567 = vmatprep.subr.mxu0 0.0
    %568 = vmatpush1.msra.mxu0 0.0
    %569 = vmatprep.subr.mxu0 0.0
    %570 = vmatpush1.msra.mxu0 0.0
    %571 = vmatprep.subr.mxu0 0.0
    %572 = vmatpush1.msra.mxu0 0.0
    %573 = vmatprep.subr.mxu0 0.0
    %574 = vmatpush1.msra.mxu0 0.0
    %575 = vmatprep.subr.mxu0 0.0
    %576 = vmatpush1.msra.mxu0 0.0
    %577 = vmatprep.subr.mxu0 0.0
    %578 = vmatpush1.msra.mxu0 0.0
    %579 = vmatprep.subr.mxu0 0.0
    %580 = vmatpush1.msra.mxu0 0.0
    %581 = vmatprep.subr.mxu0 0.0
    %582 = vmatpush1.msra.mxu0 0.0
    %583 = vmatprep.subr.mxu0 0.0
    %584 = vmatpush1.msra.mxu0 0.0
    %585 = vmatprep.subr.mxu0 0.0
    %586 = vmatpush1.msra.mxu0 0.0
    %587 = vmatprep.subr.mxu0 0.0
    %588 = vmatpush1.msra.mxu0 0.0
    %589 = vmatprep.subr.mxu0 0.0
    %590 = vmatpush1.msra.mxu0 0.0
    %591 = vmatprep.subr.mxu0 0.0
    %592 = vmatpush1.msra.mxu0 %v559
    %593 = vmatprep.subr.mxu0 0.0
    %594 = vmatpush2.msra.mxu0 0.0
    %595 = vmatprep.subr.mxu0 0.0
    %596 = vmatpush2.msra.mxu0 0.0
    %597 = vmatprep.subr.mxu0 0.0
    %598 = vmatpush2.msra.mxu0 0.0
    %599 = vmatprep.subr.mxu0 0.0
    %600 = vmatpush2.msra.mxu0 0.0
    %601 = vmatprep.subr.mxu0 0.0
    %602 = vmatpush2.msra.mxu0 0.0
    %603 = vmatprep.subr.mxu0 0.0
    %604 = vmatpush2.msra.mxu0 0.0
    %605 = vmatprep.subr.mxu0 0.0
    %606 = vmatpush2.msra.mxu0 0.0
    %607 = vmatprep.subr.mxu0 0.0
    %608 = vmatpush2.msra.mxu0 0.0
    %609 = vmatprep.subr.mxu0 0.0
    %610 = vmatpush2.msra.mxu0 0.0
    %611 = vmatprep.subr.mxu0 0.0
    %612 = vmatpush2.msra.mxu0 0.0
    %613 = vmatprep.subr.mxu0 0.0
    %614 = vmatpush2.msra.mxu0 0.0
    %615 = vmatprep.subr.mxu0 0.0
    %616 = vmatpush2.msra.mxu0 0.0
    %617 = vmatprep.subr.mxu0 0.0
    %618 = vmatpush2.msra.mxu0 0.0
    %619 = vmatprep.subr.mxu0 0.0
    %620 = vmatpush2.msra.mxu0 0.0
    %621 = vmatprep.subr.mxu0 0.0
    %622 = vmatpush2.msra.mxu0 0.0
    %623 = vmatprep.subr.mxu0 0.0
    %624 = vmatpush2.msra.mxu0 0.0
    %625 = vmatprep.mubr.f32.mxu0 0.0
    %626 = vmatmul.mubr.f32.gmra.mxu0 %v222
    %v627 = vpop.f32.mrf.mxu0
    %v628 = vadd.f32 0.0, %v627
    %v629 = vpop.f32.mrf.mxu0
    %630 = vmatprep.mubr.f32.mxu0 0.0
    %631 = vmatmul.mubr.f32.gmra.mxu0 %v225
    %v632 = vpop.f32.mrf.mxu0
    %v633 = vadd.f32 0.0, %v632
    %v634 = vpop.f32.mrf.mxu0
    %635 = vdwg.mxu0
    %v637 = vsel %vm220, %v628, 0
    %v640 = vsel %vm220, %v633, 0
    %642 = vmatprep.subr.mxu0 0.0
    %643 = vmatpush1.msra.mxu0 0.0
    %644 = vmatprep.subr.mxu0 0.0
    %645 = vmatpush1.msra.mxu0 0.0
    %646 = vmatprep.subr.mxu0 0.0
    %647 = vmatpush1.msra.mxu0 0.0
    %648 = vmatprep.subr.mxu0 0.0
    %649 = vmatpush1.msra.mxu0 0.0
    %650 = vmatprep.subr.mxu0 0.0
    %651 = vmatpush1.msra.mxu0 0.0
    %652 = vmatprep.subr.mxu0 0.0
    %653 = vmatpush1.msra.mxu0 0.0
    %654 = vmatprep.subr.mxu0 0.0
    %655 = vmatpush1.msra.mxu0 0.0
    %656 = vmatprep.subr.mxu0 0.0
    %657 = vmatpush1.msra.mxu0 0.0
    %658 = vmatprep.subr.mxu0 0.0
    %659 = vmatpush1.msra.mxu0 0.0
    %660 = vmatprep.subr.mxu0 0.0
    %661 = vmatpush1.msra.mxu0 0.0
    %662 = vmatprep.subr.mxu0 0.0
    %663 = vmatpush1.msra.mxu0 0.0
    %664 = vmatprep.subr.mxu0 0.0
    %665 = vmatpush1.msra.mxu0 0.0
    %666 = vmatprep.subr.mxu0 0.0
    %667 = vmatpush1.msra.mxu0 0.0
    %668 = vmatprep.subr.mxu0 0.0
    %669 = vmatpush1.msra.mxu0 0.0
    %670 = vmatprep.subr.mxu0 0.0
    %671 = vmatpush1.msra.mxu0 0.0
    %672 = vmatprep.subr.mxu0 0.0
    %673 = vmatpush1.msra.mxu0 %v313
    %674 = vmatprep.subr.mxu0 0.0
    %675 = vmatpush2.msra.mxu0 0.0
    %676 = vmatprep.subr.mxu0 0.0
    %677 = vmatpush2.msra.mxu0 0.0
    %678 = vmatprep.subr.mxu0 0.0
    %679 = vmatpush2.msra.mxu0 0.0
    %680 = vmatprep.subr.mxu0 0.0
    %681 = vmatpush2.msra.mxu0 0.0
    %682 = vmatprep.subr.mxu0 0.0
    %683 = vmatpush2.msra.mxu0 0.0
    %684 = vmatprep.subr.mxu0 0.0
    %685 = vmatpush2.msra.mxu0 0.0
    %686 = vmatprep.subr.mxu0 0.0
    %687 = vmatpush2.msra.mxu0 0.0
    %688 = vmatprep.subr.mxu0 0.0
    %689 = vmatpush2.msra.mxu0 0.0
    %690 = vmatprep.subr.mxu0 0.0
    %691 = vmatpush2.msra.mxu0 0.0
    %692 = vmatprep.subr.mxu0 0.0
    %693 = vmatpush2.msra.mxu0 0.0
    %694 = vmatprep.subr.mxu0 0.0
    %695 = vmatpush2.msra.mxu0 0.0
    %696 = vmatprep.subr.mxu0 0.0
    %697 = vmatpush2.msra.mxu0 0.0
    %698 = vmatprep.subr.mxu0 0.0
    %699 = vmatpush2.msra.mxu0 0.0
    %700 = vmatprep.subr.mxu0 0.0
    %701 = vmatpush2.msra.mxu0 0.0
    %702 = vmatprep.subr.mxu0 0.0
    %703 = vmatpush2.msra.mxu0 0.0
    %704 = vmatprep.subr.mxu0 0.0
    %705 = vmatpush2.msra.mxu0 0.0
    %706 = vmatprep.mubr.f32.mxu0 0.0
    %707 = vmatmul.mubr.f32.gmra.mxu0 %v637
    %v708 = vpop.f32.mrf.mxu0
    %v709 = vadd.f32 0.0, %v708
    %v710 = vpop.f32.mrf.mxu0
    %711 = vmatprep.mubr.f32.mxu0 0.0
    %712 = vmatmul.mubr.f32.gmra.mxu0 %v640
    %v713 = vpop.f32.mrf.mxu0
    %v714 = vadd.f32 0.0, %v713
    %v715 = vpop.f32.mrf.mxu0
    %716 = vdwg.mxu0
    %v717 = vmul.f32 %v709, %v50
    %v718 = vmul.f32 %v714, %v51
    %s719 = scalar_lea.vmem %s3, 16
    %v720 = vld [vmem:[%s719] sm:$0xff]
    %v721 = vld [vmem:[%s719 + $0x8] sm:$0xff]
    %vm722 = vcmask 130048
    %v724 = vsel %vm722, %v717, 0
    %v727 = vsel %vm722, %v718, 0
    %729 = vmatprep.subr.mxu0 0.0
    %730 = vmatpush1.msra.mxu0 0.0
    %731 = vmatprep.subr.mxu0 0.0
    %732 = vmatpush1.msra.mxu0 0.0
    %733 = vmatprep.subr.mxu0 0.0
    %734 = vmatpush1.msra.mxu0 0.0
    %735 = vmatprep.subr.mxu0 0.0
    %736 = vmatpush1.msra.mxu0 0.0
    %737 = vmatprep.subr.mxu0 0.0
    %738 = vmatpush1.msra.mxu0 0.0
    %739 = vmatprep.subr.mxu0 0.0
    %740 = vmatpush1.msra.mxu0 0.0
    %741 = vmatprep.subr.mxu0 0.0
    %742 = vmatpush1.msra.mxu0 0.0
    %743 = vmatprep.subr.mxu0 0.0
    %744 = vmatpush1.msra.mxu0 0.0
    %745 = vmatprep.subr.mxu0 0.0
    %746 = vmatpush1.msra.mxu0 0.0
    %747 = vmatprep.subr.mxu0 0.0
    %748 = vmatpush1.msra.mxu0 0.0
    %749 = vmatprep.subr.mxu0 0.0
    %750 = vmatpush1.msra.mxu0 0.0
    %751 = vmatprep.subr.mxu0 0.0
    %752 = vmatpush1.msra.mxu0 0.0
    %753 = vmatprep.subr.mxu0 0.0
    %754 = vmatpush1.msra.mxu0 0.0
    %755 = vmatprep.subr.mxu0 0.0
    %756 = vmatpush1.msra.mxu0 0.0
    %757 = vmatprep.subr.mxu0 0.0
    %758 = vmatpush1.msra.mxu0 %v721
    %759 = vmatprep.subr.mxu0 0.0
    %760 = vmatpush1.msra.mxu0 %v720
    %761 = vmatprep.subr.mxu0 0.0
    %762 = vmatpush2.msra.mxu0 0.0
    %763 = vmatprep.subr.mxu0 0.0
    %764 = vmatpush2.msra.mxu0 0.0
    %765 = vmatprep.subr.mxu0 0.0
    %766 = vmatpush2.msra.mxu0 0.0
    %767 = vmatprep.subr.mxu0 0.0
    %768 = vmatpush2.msra.mxu0 0.0
    %769 = vmatprep.subr.mxu0 0.0
    %770 = vmatpush2.msra.mxu0 0.0
    %771 = vmatprep.subr.mxu0 0.0
    %772 = vmatpush2.msra.mxu0 0.0
    %773 = vmatprep.subr.mxu0 0.0
    %774 = vmatpush2.msra.mxu0 0.0
    %775 = vmatprep.subr.mxu0 0.0
    %776 = vmatpush2.msra.mxu0 0.0
    %777 = vmatprep.subr.mxu0 0.0
    %778 = vmatpush2.msra.mxu0 0.0
    %779 = vmatprep.subr.mxu0 0.0
    %780 = vmatpush2.msra.mxu0 0.0
    %781 = vmatprep.subr.mxu0 0.0
    %782 = vmatpush2.msra.mxu0 0.0
    %783 = vmatprep.subr.mxu0 0.0
    %784 = vmatpush2.msra.mxu0 0.0
    %785 = vmatprep.subr.mxu0 0.0
    %786 = vmatpush2.msra.mxu0 0.0
    %787 = vmatprep.subr.mxu0 0.0
    %788 = vmatpush2.msra.mxu0 0.0
    %789 = vmatprep.subr.mxu0 0.0
    %790 = vmatpush2.msra.mxu0 0.0
    %791 = vmatprep.subr.mxu0 0.0
    %792 = vmatpush2.msra.mxu0 0.0
    %793 = vmatprep.mubr.f32.mxu0 0.0
    %794 = vmatmul.mubr.f32.gmra.mxu0 %v724
    %v795 = vpop.f32.mrf.mxu0
    %v796 = vadd.f32 0.0, %v795
    %v797 = vpop.f32.mrf.mxu0
    %798 = vmatprep.mubr.f32.mxu0 0.0
    %799 = vmatmul.mubr.f32.gmra.mxu0 %v727
    %v800 = vpop.f32.mrf.mxu0
    %v801 = vadd.f32 0.0, %v800
    %v802 = vpop.f32.mrf.mxu0
    %803 = vdwg.mxu0
    %v805 = vsel %vm722, %v390, 0
    %v808 = vsel %vm722, %v391, 0
    %810 = vmatprep.subr.mxu0 0.0
    %811 = vmatpush1.msra.mxu0 0.0
    %812 = vmatprep.subr.mxu0 0.0
    %813 = vmatpush1.msra.mxu0 0.0
    %814 = vmatprep.subr.mxu0 0.0
    %815 = vmatpush1.msra.mxu0 0.0
    %816 = vmatprep.subr.mxu0 0.0
    %817 = vmatpush1.msra.mxu0 0.0
    %818 = vmatprep.subr.mxu0 0.0
    %819 = vmatpush1.msra.mxu0 0.0
    %820 = vmatprep.subr.mxu0 0.0
    %821 = vmatpush1.msra.mxu0 0.0
    %822 = vmatprep.subr.mxu0 0.0
    %823 = vmatpush1.msra.mxu0 0.0
    %824 = vmatprep.subr.mxu0 0.0
    %825 = vmatpush1.msra.mxu0 0.0
    %826 = vmatprep.subr.mxu0 0.0
    %827 = vmatpush1.msra.mxu0 0.0
    %828 = vmatprep.subr.mxu0 0.0
    %829 = vmatpush1.msra.mxu0 0.0
    %830 = vmatprep.subr.mxu0 0.0
    %831 = vmatpush1.msra.mxu0 0.0
    %832 = vmatprep.subr.mxu0 0.0
    %833 = vmatpush1.msra.mxu0 0.0
    %834 = vmatprep.subr.mxu0 0.0
    %835 = vmatpush1.msra.mxu0 0.0
    %836 = vmatprep.subr.mxu0 0.0
    %837 = vmatpush1.msra.mxu0 0.0
    %838 = vmatprep.subr.mxu0 0.0
    %839 = vmatpush1.msra.mxu0 %v393
    %840 = vmatprep.subr.mxu0 0.0
    %841 = vmatpush1.msra.mxu0 %v392
    %842 = vmatprep.subr.mxu0 0.0
    %843 = vmatpush2.msra.mxu0 0.0
    %844 = vmatprep.subr.mxu0 0.0
    %845 = vmatpush2.msra.mxu0 0.0
    %846 = vmatprep.subr.mxu0 0.0
    %847 = vmatpush2.msra.mxu0 0.0
    %848 = vmatprep.subr.mxu0 0.0
    %849 = vmatpush2.msra.mxu0 0.0
    %850 = vmatprep.subr.mxu0 0.0
    %851 = vmatpush2.msra.mxu0 0.0
    %852 = vmatprep.subr.mxu0 0.0
    %853 = vmatpush2.msra.mxu0 0.0
    %854 = vmatprep.subr.mxu0 0.0
    %855 = vmatpush2.msra.mxu0 0.0
    %856 = vmatprep.subr.mxu0 0.0
    %857 = vmatpush2.msra.mxu0 0.0
    %858 = vmatprep.subr.mxu0 0.0
    %859 = vmatpush2.msra.mxu0 0.0
    %860 = vmatprep.subr.mxu0 0.0
    %861 = vmatpush2.msra.mxu0 0.0
    %862 = vmatprep.subr.mxu0 0.0
    %863 = vmatpush2.msra.mxu0 0.0
    %864 = vmatprep.subr.mxu0 0.0
    %865 = vmatpush2.msra.mxu0 0.0
    %866 = vmatprep.subr.mxu0 0.0
    %867 = vmatpush2.msra.mxu0 0.0
    %868 = vmatprep.subr.mxu0 0.0
    %869 = vmatpush2.msra.mxu0 0.0
    %870 = vmatprep.subr.mxu0 0.0
    %871 = vmatpush2.msra.mxu0 0.0
    %872 = vmatprep.subr.mxu0 0.0
    %873 = vmatpush2.msra.mxu0 0.0
    %874 = vmatprep.mubr.f32.mxu0 0.0
    %875 = vmatmul.mubr.f32.gmra.mxu0 %v805
    %v876 = vpop.f32.mrf.mxu0
    %v877 = vadd.f32 %v796, %v876
    %v878 = vpop.f32.mrf.mxu0
    %879 = vmatprep.mubr.f32.mxu0 0.0
    %880 = vmatmul.mubr.f32.gmra.mxu0 %v808
    %v881 = vpop.f32.mrf.mxu0
    %v882 = vadd.f32 %v801, %v881
    %v883 = vpop.f32.mrf.mxu0
    %884 = vdwg.mxu0
    %s885 = scalar_lea.vmem %s2, 128
    %v886 = vld [vmem:[%s885] sm:$0xff]
    %v887 = vld [vmem:[%s885 + $0x8] sm:$0xff]
    %v888 = vld [vmem:[%s885 + $0x10] sm:$0xff]
    %v889 = vld [vmem:[%s885 + $0x18] sm:$0xff]
    %v890 = vld [vmem:[%s885 + $0x20] sm:$0xff]
    %v891 = vld [vmem:[%s885 + $0x28] sm:$0xff]
    %v892 = vld [vmem:[%s885 + $0x30] sm:$0xff]
    %v893 = vld [vmem:[%s885 + $0x38] sm:$0xff]
    %894 = vmatprep.subr.mxu0 0.0
    %895 = vmatpush1.msra.mxu0 0.0
    %896 = vmatprep.subr.mxu0 0.0
    %897 = vmatpush1.msra.mxu0 0.0
    %898 = vmatprep.subr.mxu0 0.0
    %899 = vmatpush1.msra.mxu0 0.0
    %900 = vmatprep.subr.mxu0 0.0
    %901 = vmatpush1.msra.mxu0 0.0
    %902 = vmatprep.subr.mxu0 0.0
    %903 = vmatpush1.msra.mxu0 0.0
    %904 = vmatprep.subr.mxu0 0.0
    %905 = vmatpush1.msra.mxu0 0.0
    %906 = vmatprep.subr.mxu0 0.0
    %907 = vmatpush1.msra.mxu0 0.0
    %908 = vmatprep.subr.mxu0 0.0
    %909 = vmatpush1.msra.mxu0 0.0
    %910 = vmatprep.subr.mxu0 0.0
    %911 = vmatpush1.msra.mxu0 %v893
    %912 = vmatprep.subr.mxu0 0.0
    %913 = vmatpush1.msra.mxu0 %v892
    %914 = vmatprep.subr.mxu0 0.0
    %915 = vmatpush1.msra.mxu0 %v891
    %916 = vmatprep.subr.mxu0 0.0
    %917 = vmatpush1.msra.mxu0 %v890
    %918 = vmatprep.subr.mxu0 0.0
    %919 = vmatpush1.msra.mxu0 %v889
    %920 = vmatprep.subr.mxu0 0.0
    %921 = vmatpush1.msra.mxu0 %v888
    %922 = vmatprep.subr.mxu0 0.0
    %923 = vmatpush1.msra.mxu0 %v887
    %924 = vmatprep.subr.mxu0 0.0
    %925 = vmatpush1.msra.mxu0 %v886
    %926 = vmatprep.subr.mxu0 0.0
    %927 = vmatpush2.msra.mxu0 0.0
    %928 = vmatprep.subr.mxu0 0.0
    %929 = vmatpush2.msra.mxu0 0.0
    %930 = vmatprep.subr.mxu0 0.0
    %931 = vmatpush2.msra.mxu0 0.0
    %932 = vmatprep.subr.mxu0 0.0
    %933 = vmatpush2.msra.mxu0 0.0
    %934 = vmatprep.subr.mxu0 0.0
    %935 = vmatpush2.msra.mxu0 0.0
    %936 = vmatprep.subr.mxu0 0.0
    %937 = vmatpush2.msra.mxu0 0.0
    %938 = vmatprep.subr.mxu0 0.0
    %939 = vmatpush2.msra.mxu0 0.0
    %940 = vmatprep.subr.mxu0 0.0
    %941 = vmatpush2.msra.mxu0 0.0
    %942 = vmatprep.subr.mxu0 0.0
    %943 = vmatpush2.msra.mxu0 0.0
    %944 = vmatprep.subr.mxu0 0.0
    %945 = vmatpush2.msra.mxu0 0.0
    %946 = vmatprep.subr.mxu0 0.0
    %947 = vmatpush2.msra.mxu0 0.0
    %948 = vmatprep.subr.mxu0 0.0
    %949 = vmatpush2.msra.mxu0 0.0
    %950 = vmatprep.subr.mxu0 0.0
    %951 = vmatpush2.msra.mxu0 0.0
    %952 = vmatprep.subr.mxu0 0.0
    %953 = vmatpush2.msra.mxu0 0.0
    %954 = vmatprep.subr.mxu0 0.0
    %955 = vmatpush2.msra.mxu0 0.0
    %956 = vmatprep.subr.mxu0 0.0
    %957 = vmatpush2.msra.mxu0 0.0
    %958 = vmatprep.mubr.f32.mxu0 0.0
    %959 = vmatmul.mubr.f32.gmra.mxu0 %v62
    %v960 = vpop.f32.mrf.mxu0
    %v961 = vadd.f32 0.0, %v960
    %v962 = vpop.f32.mrf.mxu0
    %963 = vdwg.mxu0
    %v965 = vsel %vm60, %v961, 0
    %967 = vmatprep.subr.mxu0 0.0
    %968 = vmatpush1.xpose.msra.mxu0 0.0
    %969 = vmatprep.subr.mxu0 0.0
    %970 = vmatpush1.xpose.msra.mxu0 0.0
    %971 = vmatprep.subr.mxu0 0.0
    %972 = vmatpush1.xpose.msra.mxu0 0.0
    %973 = vmatprep.subr.mxu0 0.0
    %974 = vmatpush1.xpose.msra.mxu0 0.0
    %975 = vmatprep.subr.mxu0 0.0
    %976 = vmatpush1.xpose.msra.mxu0 0.0
    %977 = vmatprep.subr.mxu0 0.0
    %978 = vmatpush1.xpose.msra.mxu0 0.0
    %979 = vmatprep.subr.mxu0 0.0
    %980 = vmatpush1.xpose.msra.mxu0 0.0
    %981 = vmatprep.subr.mxu0 0.0
    %982 = vmatpush1.xpose.msra.mxu0 0.0
    %983 = vmatprep.subr.mxu0 0.0
    %984 = vmatpush1.xpose.msra.mxu0 0.0
    %985 = vmatprep.subr.mxu0 0.0
    %986 = vmatpush1.xpose.msra.mxu0 0.0
    %987 = vmatprep.subr.mxu0 0.0
    %988 = vmatpush1.xpose.msra.mxu0 0.0
    %989 = vmatprep.subr.mxu0 0.0
    %990 = vmatpush1.xpose.msra.mxu0 0.0
    %991 = vmatprep.subr.mxu0 0.0
    %992 = vmatpush1.xpose.msra.mxu0 0.0
    %993 = vmatprep.subr.mxu0 0.0
    %994 = vmatpush1.xpose.msra.mxu0 0.0
    %995 = vmatprep.subr.mxu0 0.0
    %996 = vmatpush1.xpose.msra.mxu0 0.0
    %997 = vmatprep.subr.mxu0 0.0
    %998 = vmatpush1.xpose.msra.mxu0 %v62
    %999 = vmatprep.subr.mxu0 0.0
    %1000 = vmatpush2.xpose.msra.mxu0 0.0
    %1001 = vmatprep.subr.mxu0 0.0
    %1002 = vmatpush2.xpose.msra.mxu0 0.0
    %1003 = vmatprep.subr.mxu0 0.0
    %1004 = vmatpush2.xpose.msra.mxu0 0.0
    %1005 = vmatprep.subr.mxu0 0.0
    %1006 = vmatpush2.xpose.msra.mxu0 0.0
    %1007 = vmatprep.subr.mxu0 0.0
    %1008 = vmatpush2.xpose.msra.mxu0 0.0
    %1009 = vmatprep.subr.mxu0 0.0
    %1010 = vmatpush2.xpose.msra.mxu0 0.0
    %1011 = vmatprep.subr.mxu0 0.0
    %1012 = vmatpush2.xpose.msra.mxu0 0.0
    %1013 = vmatprep.subr.mxu0 0.0
    %1014 = vmatpush2.xpose.msra.mxu0 0.0
    %1015 = vmatprep.subr.mxu0 0.0
    %1016 = vmatpush2.xpose.msra.mxu0 0.0
    %1017 = vmatprep.subr.mxu0 0.0
    %1018 = vmatpush2.xpose.msra.mxu0 0.0
    %1019 = vmatprep.subr.mxu0 0.0
    %1020 = vmatpush2.xpose.msra.mxu0 0.0
    %1021 = vmatprep.subr.mxu0 0.0
    %1022 = vmatpush2.xpose.msra.mxu0 0.0
    %1023 = vmatprep.subr.mxu0 0.0
    %1024 = vmatpush2.xpose.msra.mxu0 0.0
    %1025 = vmatprep.subr.mxu0 0.0
    %1026 = vmatpush2.xpose.msra.mxu0 0.0
    %1027 = vmatprep.subr.mxu0 0.0
    %1028 = vmatpush2.xpose.msra.mxu0 0.0
    %1029 = vmatprep.subr.mxu0 0.0
    %1030 = vmatpush2.xpose.msra.mxu0 0.0
    %1031 = vmatprep.mubr.f32.mxu0 0.0
    %1032 = vmatmul.mubr.f32.gmra.mxu0 %v965
    %v1033 = vpop.f32.mrf.mxu0
    %v1034 = vadd.f32 0.0, %v1033
    %v1035 = vpop.f32.mrf.mxu0
    %1036 = vdwg.mxu0
    %v1037 = vmul.f32 %v1034, 0.125
    %v1038 = vsel %vm208, %v1037, -inf
    %1039 = vmax.xlane.f32.xlu0 %v1038
    %v1040 = vpop.xlane.xlu0 %1039
    %v1041 = vsub.f32 %v1037, %v1040
    %v1042 = vmul.f32 %v1041, 1.442695
    %v1043 = vpow.pop %v1042
    %v1044 = vsel %vm208, %v1043, 0.0
    %1045 = vadd.xlane.f32.xlu0 %v1044
    %v1046 = vpop.xlane.xlu0 %1045
    %v1047 = vrcp.pop %v1046
    %v1048 = vmul.f32 %v1043, %v1047
    %v1050 = vsel %vm227, %v1048, 0
    %1052 = vmatprep.subr.mxu0 0.0
    %1053 = vmatpush1.msra.mxu0 0.0
    %1054 = vmatprep.subr.mxu0 0.0
    %1055 = vmatpush1.msra.mxu0 0.0
    %1056 = vmatprep.subr.mxu0 0.0
    %1057 = vmatpush1.msra.mxu0 0.0
    %1058 = vmatprep.subr.mxu0 0.0
    %1059 = vmatpush1.msra.mxu0 0.0
    %1060 = vmatprep.subr.mxu0 0.0
    %1061 = vmatpush1.msra.mxu0 0.0
    %1062 = vmatprep.subr.mxu0 0.0
    %1063 = vmatpush1.msra.mxu0 0.0
    %1064 = vmatprep.subr.mxu0 0.0
    %1065 = vmatpush1.msra.mxu0 0.0
    %1066 = vmatprep.subr.mxu0 0.0
    %1067 = vmatpush1.msra.mxu0 0.0
    %1068 = vmatprep.subr.mxu0 0.0
    %1069 = vmatpush1.msra.mxu0 0.0
    %1070 = vmatprep.subr.mxu0 0.0
    %1071 = vmatpush1.msra.mxu0 0.0
    %1072 = vmatprep.subr.mxu0 0.0
    %1073 = vmatpush1.msra.mxu0 0.0
    %1074 = vmatprep.subr.mxu0 0.0
    %1075 = vmatpush1.msra.mxu0 0.0
    %1076 = vmatprep.subr.mxu0 0.0
    %1077 = vmatpush1.msra.mxu0 0.0
    %1078 = vmatprep.subr.mxu0 0.0
    %1079 = vmatpush1.msra.mxu0 0.0
    %1080 = vmatprep.subr.mxu0 0.0
    %1081 = vmatpush1.msra.mxu0 0.0
    %1082 = vmatprep.subr.mxu0 0.0
    %1083 = vmatpush1.msra.mxu0 %v1050
    %1084 = vmatprep.subr.mxu0 0.0
    %1085 = vmatpush2.msra.mxu0 0.0
    %1086 = vmatprep.subr.mxu0 0.0
    %1087 = vmatpush2.msra.mxu0 0.0
    %1088 = vmatprep.subr.mxu0 0.0
    %1089 = vmatpush2.msra.mxu0 0.0
    %1090 = vmatprep.subr.mxu0 0.0
    %1091 = vmatpush2.msra.mxu0 0.0
    %1092 = vmatprep.subr.mxu0 0.0
    %1093 = vmatpush2.msra.mxu0 0.0
    %1094 = vmatprep.subr.mxu0 0.0
    %1095 = vmatpush2.msra.mxu0 0.0
    %1096 = vmatprep.subr.mxu0 0.0
    %1097 = vmatpush2.msra.mxu0 0.0
    %1098 = vmatprep.subr.mxu0 0.0
    %1099 = vmatpush2.msra.mxu0 0.0
    %1100 = vmatprep.subr.mxu0 0.0
    %1101 = vmatpush2.msra.mxu0 0.0
    %1102 = vmatprep.subr.mxu0 0.0
    %1103 = vmatpush2.msra.mxu0 0.0
    %1104 = vmatprep.subr.mxu0 0.0
    %1105 = vmatpush2.msra.mxu0 0.0
    %1106 = vmatprep.subr.mxu0 0.0
    %1107 = vmatpush2.msra.mxu0 0.0
    %1108 = vmatprep.subr.mxu0 0.0
    %1109 = vmatpush2.msra.mxu0 0.0
    %1110 = vmatprep.subr.mxu0 0.0
    %1111 = vmatpush2.msra.mxu0 0.0
    %1112 = vmatprep.subr.mxu0 0.0
    %1113 = vmatpush2.msra.mxu0 0.0
    %1114 = vmatprep.subr.mxu0 0.0
    %1115 = vmatpush2.msra.mxu0 0.0
    %1116 = vmatprep.mubr.f32.mxu0 0.0
    %1117 = vmatmul.mubr.f32.gmra.mxu0 %v222
    %v1118 = vpop.f32.mrf.mxu0
    %v1119 = vadd.f32 0.0, %v1118
    %v1120 = vpop.f32.mrf.mxu0
    %1121 = vmatprep.mubr.f32.mxu0 0.0
    %1122 = vmatmul.mubr.f32.gmra.mxu0 %v225
    %v1123 = vpop.f32.mrf.mxu0
    %v1124 = vadd.f32 0.0, %v1123
    %v1125 = vpop.f32.mrf.mxu0
    %1126 = vdwg.mxu0
    %v1128 = vsel %vm220, %v1119, 0
    %v1131 = vsel %vm220, %v1124, 0
    %1133 = vmatprep.subr.mxu0 0.0
    %1134 = vmatpush1.msra.mxu0 0.0
    %1135 = vmatprep.subr.mxu0 0.0
    %1136 = vmatpush1.msra.mxu0 0.0
    %1137 = vmatprep.subr.mxu0 0.0
    %1138 = vmatpush1.msra.mxu0 0.0
    %1139 = vmatprep.subr.mxu0 0.0
    %1140 = vmatpush1.msra.mxu0 0.0
    %1141 = vmatprep.subr.mxu0 0.0
    %1142 = vmatpush1.msra.mxu0 0.0
    %1143 = vmatprep.subr.mxu0 0.0
    %1144 = vmatpush1.msra.mxu0 0.0
    %1145 = vmatprep.subr.mxu0 0.0
    %1146 = vmatpush1.msra.mxu0 0.0
    %1147 = vmatprep.subr.mxu0 0.0
    %1148 = vmatpush1.msra.mxu0 0.0
    %1149 = vmatprep.subr.mxu0 0.0
    %1150 = vmatpush1.msra.mxu0 0.0
    %1151 = vmatprep.subr.mxu0 0.0
    %1152 = vmatpush1.msra.mxu0 0.0
    %1153 = vmatprep.subr.mxu0 0.0
    %1154 = vmatpush1.msra.mxu0 0.0
    %1155 = vmatprep.subr.mxu0 0.0
    %1156 = vmatpush1.msra.mxu0 0.0
    %1157 = vmatprep.subr.mxu0 0.0
    %1158 = vmatpush1.msra.mxu0 0.0
    %1159 = vmatprep.subr.mxu0 0.0
    %1160 = vmatpush1.msra.mxu0 0.0
    %1161 = vmatprep.subr.mxu0 0.0
    %1162 = vmatpush1.msra.mxu0 0.0
    %1163 = vmatprep.subr.mxu0 0.0
    %1164 = vmatpush1.msra.mxu0 %v313
    %1165 = vmatprep.subr.mxu0 0.0
    %1166 = vmatpush2.msra.mxu0 0.0
    %1167 = vmatprep.subr.mxu0 0.0
    %1168 = vmatpush2.msra.mxu0 0.0
    %1169 = vmatprep.subr.mxu0 0.0
    %1170 = vmatpush2.msra.mxu0 0.0
    %1171 = vmatprep.subr.mxu0 0.0
    %1172 = vmatpush2.msra.mxu0 0.0
    %1173 = vmatprep.subr.mxu0 0.0
    %1174 = vmatpush2.msra.mxu0 0.0
    %1175 = vmatprep.subr.mxu0 0.0
    %1176 = vmatpush2.msra.mxu0 0.0
    %1177 = vmatprep.subr.mxu0 0.0
    %1178 = vmatpush2.msra.mxu0 0.0
    %1179 = vmatprep.subr.mxu0 0.0
    %1180 = vmatpush2.msra.mxu0 0.0
    %1181 = vmatprep.subr.mxu0 0.0
    %1182 = vmatpush2.msra.mxu0 0.0
    %1183 = vmatprep.subr.mxu0 0.0
    %1184 = vmatpush2.msra.mxu0 0.0
    %1185 = vmatprep.subr.mxu0 0.0
    %1186 = vmatpush2.msra.mxu0 0.0
    %1187 = vmatprep.subr.mxu0 0.0
    %1188 = vmatpush2.msra.mxu0 0.0
    %1189 = vmatprep.subr.mxu0 0.0
    %1190 = vmatpush2.msra.mxu0 0.0
    %1191 = vmatprep.subr.mxu0 0.0
    %1192 = vmatpush2.msra.mxu0 0.0
    %1193 = vmatprep.subr.mxu0 0.0
    %1194 = vmatpush2.msra.mxu0 0.0
    %1195 = vmatprep.subr.mxu0 0.0
    %1196 = vmatpush2.msra.mxu0 0.0
    %1197 = vmatprep.mubr.f32.mxu0 0.0
    %1198 = vmatmul.mubr.f32.gmra.mxu0 %v1128
    %v1199 = vpop.f32.mrf.mxu0
    %v1200 = vadd.f32 0.0, %v1199
    %v1201 = vpop.f32.mrf.mxu0
    %1202 = vmatprep.mubr.f32.mxu0 0.0
    %1203 = vmatmul.mubr.f32.gmra.mxu0 %v1131
    %v1204 = vpop.f32.mrf.mxu0
    %v1205 = vadd.f32 0.0, %v1204
    %v1206 = vpop.f32.mrf.mxu0
    %1207 = vdwg.mxu0
    %v1208 = vmul.f32 %v1200, %v50
    %v1209 = vmul.f32 %v1205, %v51
    %s1210 = scalar_lea.vmem %s3, 32
    %v1211 = vld [vmem:[%s1210] sm:$0xff]
    %v1212 = vld [vmem:[%s1210 + $0x8] sm:$0xff]
    %v1214 = vsel %vm722, %v1208, 0
    %v1217 = vsel %vm722, %v1209, 0
    %1219 = vmatprep.subr.mxu0 0.0
    %1220 = vmatpush1.msra.mxu0 0.0
    %1221 = vmatprep.subr.mxu0 0.0
    %1222 = vmatpush1.msra.mxu0 0.0
    %1223 = vmatprep.subr.mxu0 0.0
    %1224 = vmatpush1.msra.mxu0 0.0
    %1225 = vmatprep.subr.mxu0 0.0
    %1226 = vmatpush1.msra.mxu0 0.0
    %1227 = vmatprep.subr.mxu0 0.0
    %1228 = vmatpush1.msra.mxu0 0.0
    %1229 = vmatprep.subr.mxu0 0.0
    %1230 = vmatpush1.msra.mxu0 0.0
    %1231 = vmatprep.subr.mxu0 0.0
    %1232 = vmatpush1.msra.mxu0 0.0
    %1233 = vmatprep.subr.mxu0 0.0
    %1234 = vmatpush1.msra.mxu0 0.0
    %1235 = vmatprep.subr.mxu0 0.0
    %1236 = vmatpush1.msra.mxu0 0.0
    %1237 = vmatprep.subr.mxu0 0.0
    %1238 = vmatpush1.msra.mxu0 0.0
    %1239 = vmatprep.subr.mxu0 0.0
    %1240 = vmatpush1.msra.mxu0 0.0
    %1241 = vmatprep.subr.mxu0 0.0
    %1242 = vmatpush1.msra.mxu0 0.0
    %1243 = vmatprep.subr.mxu0 0.0
    %1244 = vmatpush1.msra.mxu0 0.0
    %1245 = vmatprep.subr.mxu0 0.0
    %1246 = vmatpush1.msra.mxu0 0.0
    %1247 = vmatprep.subr.mxu0 0.0
    %1248 = vmatpush1.msra.mxu0 %v1212
    %1249 = vmatprep.subr.mxu0 0.0
    %1250 = vmatpush1.msra.mxu0 %v1211
    %1251 = vmatprep.subr.mxu0 0.0
    %1252 = vmatpush2.msra.mxu0 0.0
    %1253 = vmatprep.subr.mxu0 0.0
    %1254 = vmatpush2.msra.mxu0 0.0
    %1255 = vmatprep.subr.mxu0 0.0
    %1256 = vmatpush2.msra.mxu0 0.0
    %1257 = vmatprep.subr.mxu0 0.0
    %1258 = vmatpush2.msra.mxu0 0.0
    %1259 = vmatprep.subr.mxu0 0.0
    %1260 = vmatpush2.msra.mxu0 0.0
    %1261 = vmatprep.subr.mxu0 0.0
    %1262 = vmatpush2.msra.mxu0 0.0
    %1263 = vmatprep.subr.mxu0 0.0
    %1264 = vmatpush2.msra.mxu0 0.0
    %1265 = vmatprep.subr.mxu0 0.0
    %1266 = vmatpush2.msra.mxu0 0.0
    %1267 = vmatprep.subr.mxu0 0.0
    %1268 = vmatpush2.msra.mxu0 0.0
    %1269 = vmatprep.subr.mxu0 0.0
    %1270 = vmatpush2.msra.mxu0 0.0
    %1271 = vmatprep.subr.mxu0 0.0
    %1272 = vmatpush2.msra.mxu0 0.0
    %1273 = vmatprep.subr.mxu0 0.0
    %1274 = vmatpush2.msra.mxu0 0.0
    %1275 = vmatprep.subr.mxu0 0.0
    %1276 = vmatpush2.msra.mxu0 0.0
    %1277 = vmatprep.subr.mxu0 0.0
    %1278 = vmatpush2.msra.mxu0 0.0
    %1279 = vmatprep.subr.mxu0 0.0
    %1280 = vmatpush2.msra.mxu0 0.0
    %1281 = vmatprep.subr.mxu0 0.0
    %1282 = vmatpush2.msra.mxu0 0.0
    %1283 = vmatprep.mubr.f32.mxu0 0.0
    %1284 = vmatmul.mubr.f32.gmra.mxu0 %v1214
    %v1285 = vpop.f32.mrf.mxu0
    %v1286 = vadd.f32 0.0, %v1285
    %v1287 = vpop.f32.mrf.mxu0
    %1288 = vmatprep.mubr.f32.mxu0 0.0
    %1289 = vmatmul.mubr.f32.gmra.mxu0 %v1217
    %v1290 = vpop.f32.mrf.mxu0
    %v1291 = vadd.f32 0.0, %v1290
    %v1292 = vpop.f32.mrf.mxu0
    %1293 = vdwg.mxu0
    %v1294 = vadd.f32 %v877, %v1286
    %v1295 = vadd.f32 %v882, %v1291
    %v1296 = vld [vmem:[%s5] sm:$0xff]
    %v1297 = vld [vmem:[%s5 + $0x8] sm:$0xff]
    %1299 = vset.pattern.permute.xlu0 0
    %1300 = vperm.xlu0 %1299, %v1296
    %v1301 = vpop.permute.xlu0 %1300
    %1304 = vset.pattern.permute.xlu0 0
    %1305 = vperm.xlu0 %1304, %v1297
    %v1306 = vpop.permute.xlu0 %1305
    %v1309 = vsel %vm722, %v1294, 0
    %v1312 = vsel %vm722, %v1295, 0
    %1314 = vmatprep.subr.mxu0 0.0
    %1315 = vmatpush1.msra.mxu0 0.0
    %1316 = vmatprep.subr.mxu0 0.0
    %1317 = vmatpush1.msra.mxu0 0.0
    %1318 = vmatprep.subr.mxu0 0.0
    %1319 = vmatpush1.msra.mxu0 0.0
    %1320 = vmatprep.subr.mxu0 0.0
    %1321 = vmatpush1.msra.mxu0 0.0
    %1322 = vmatprep.subr.mxu0 0.0
    %1323 = vmatpush1.msra.mxu0 0.0
    %1324 = vmatprep.subr.mxu0 0.0
    %1325 = vmatpush1.msra.mxu0 0.0
    %1326 = vmatprep.subr.mxu0 0.0
    %1327 = vmatpush1.msra.mxu0 0.0
    %1328 = vmatprep.subr.mxu0 0.0
    %1329 = vmatpush1.msra.mxu0 0.0
    %1330 = vmatprep.subr.mxu0 0.0
    %1331 = vmatpush1.msra.mxu0 0.0
    %1332 = vmatprep.subr.mxu0 0.0
    %1333 = vmatpush1.msra.mxu0 0.0
    %1334 = vmatprep.subr.mxu0 0.0
    %1335 = vmatpush1.msra.mxu0 0.0
    %1336 = vmatprep.subr.mxu0 0.0
    %1337 = vmatpush1.msra.mxu0 0.0
    %1338 = vmatprep.subr.mxu0 0.0
    %1339 = vmatpush1.msra.mxu0 0.0
    %1340 = vmatprep.subr.mxu0 0.0
    %1341 = vmatpush1.msra.mxu0 0.0
    %1342 = vmatprep.subr.mxu0 %v46
    %1343 = vmatpush1.msra.mxu0 %v45
    %1344 = vmatprep.subr.mxu0 %v44
    %1345 = vmatpush1.msra.mxu0 %v43
    %1346 = vmatprep.subr.mxu0 0.0
    %1347 = vmatpush2.msra.mxu0 0.0
    %1348 = vmatprep.subr.mxu0 0.0
    %1349 = vmatpush2.msra.mxu0 0.0
    %1350 = vmatprep.subr.mxu0 0.0
    %1351 = vmatpush2.msra.mxu0 0.0
    %1352 = vmatprep.subr.mxu0 0.0
    %1353 = vmatpush2.msra.mxu0 0.0
    %1354 = vmatprep.subr.mxu0 0.0
    %1355 = vmatpush2.msra.mxu0 0.0
    %1356 = vmatprep.subr.mxu0 0.0
    %1357 = vmatpush2.msra.mxu0 0.0
    %1358 = vmatprep.subr.mxu0 0.0
    %1359 = vmatpush2.msra.mxu0 0.0
    %1360 = vmatprep.subr.mxu0 0.0
    %1361 = vmatpush2.msra.mxu0 0.0
    %1362 = vmatprep.subr.mxu0 0.0
    %1363 = vmatpush2.msra.mxu0 0.0
    %1364 = vmatprep.subr.mxu0 0.0
    %1365 = vmatpush2.msra.mxu0 0.0
    %1366 = vmatprep.subr.mxu0 0.0
    %1367 = vmatpush2.msra.mxu0 0.0
    %1368 = vmatprep.subr.mxu0 0.0
    %1369 = vmatpush2.msra.mxu0 0.0
    %1370 = vmatprep.subr.mxu0 0.0
    %1371 = vmatpush2.msra.mxu0 0.0
    %1372 = vmatprep.subr.mxu0 0.0
    %1373 = vmatpush2.msra.mxu0 0.0
    %1374 = vmatprep.subr.mxu0 0.0
    %1375 = vmatpush2.msra.mxu0 0.0
    %1376 = vmatprep.subr.mxu0 0.0
    %1377 = vmatpush2.msra.mxu0 0.0
    %1378 = vmatprep.mubr.f32.mxu0 0.0
    %1379 = vmatmul.mubr.f32.gmra.mxu0 %v1309
    %v1380 = vpop.f32.mrf.mxu0
    %v1381 = vadd.f32 %v1301, %v1380
    %v1382 = vpop.f32.mrf.mxu0
    %v1383 = vadd.f32 %v1301, %v1382
    %1384 = vmatprep.mubr.f32.mxu0 0.0
    %1385 = vmatmul.mubr.f32.gmra.mxu0 %v1312
    %v1386 = vpop.f32.mrf.mxu0
    %v1387 = vadd.f32 %v1306, %v1386
    %v1388 = vpop.f32.mrf.mxu0
    %v1389 = vadd.f32 %v1306, %v1388
    %1390 = vdwg.mxu0
    %v1391 = vmul.f32 %v1381, 0.5
    %v1392 = vmul.f32 %v1383, 0.5
    %v1393 = vmul.f32 %v1387, 0.5
    %v1394 = vmul.f32 %v1389, 0.5
    %v1395 = vmul.f32 %v1381, 0.70710677
    %v1396 = vmul.f32 %v1383, 0.70710677
    %v1397 = vmul.f32 %v1387, 0.70710677
    %v1398 = vmul.f32 %v1389, 0.70710677
    %v1399 = vand.u32 2147483647, %v1395
    %v1400 = vand.u32 2147483647, %v1396
    %v1401 = vand.u32 2147483647, %v1397
    %v1402 = vand.u32 2147483647, %v1398
    %v1403 = vmul.f32 %v1399, 0.3275911
    %v1404 = vmul.f32 %v1400, 0.3275911
    %v1405 = vmul.f32 %v1401, 0.3275911
    %v1406 = vmul.f32 %v1402, 0.3275911
    %v1407 = vadd.f32 %v1403, 1.0
    %v1408 = vadd.f32 %v1404, 1.0
    %v1409 = vadd.f32 %v1405, 1.0
    %v1410 = vadd.f32 %v1406, 1.0
    %v1411 = vrcp.pop %v1407
    %v1412 = vmul.f32 1.0, %v1411
    %v1413 = vrcp.pop %v1408
    %v1414 = vmul.f32 1.0, %v1413
    %v1415 = vrcp.pop %v1409
    %v1416 = vmul.f32 1.0, %v1415
    %v1417 = vrcp.pop %v1410
    %v1418 = vmul.f32 1.0, %v1417
    %v1419 = vmul.f32 %v1412, 1.0614054
    %v1420 = vmul.f32 %v1414, 1.0614054
    %v1421 = vmul.f32 %v1416, 1.0614054
    %v1422 = vmul.f32 %v1418, 1.0614054
    %v1423 = vadd.f32 %v1419, -1.4531521
    %v1424 = vadd.f32 %v1420, -1.4531521
    %v1425 = vadd.f32 %v1421, -1.4531521
    %v1426 = vadd.f32 %v1422, -1.4531521
    %v1427 = vmul.f32 %v1423, %v1412
    %v1428 = vmul.f32 %v1424, %v1414
    %v1429 = vmul.f32 %v1425, %v1416
    %v1430 = vmul.f32 %v1426, %v1418
    %v1431 = vadd.f32 %v1427, 1.4214138
    %v1432 = vadd.f32 %v1428, 1.4214138
    %v1433 = vadd.f32 %v1429, 1.4214138
    %v1434 = vadd.f32 %v1430, 1.4214138
    %v1435 = vmul.f32 %v1431, %v1412
    %v1436 = vmul.f32 %v1432, %v1414
    %v1437 = vmul.f32 %v1433, %v1416
    %v1438 = vmul.f32 %v1434, %v1418
    %v1439 = vadd.f32 %v1435, -0.28449672
    %v1440 = vadd.f32 %v1436, -0.28449672
    %v1441 = vadd.f32 %v1437, -0.28449672
    %v1442 = vadd.f32 %v1438, -0.28449672
    %v1443 = vmul.f32 %v1439, %v1412
    %v1444 = vmul.f32 %v1440, %v1414
    %v1445 = vmul.f32 %v1441, %v1416
    %v1446 = vmul.f32 %v1442, %v1418
    %v1447 = vadd.f32 %v1443, 0.2548296
    %v1448 = vadd.f32 %v1444, 0.2548296
    %v1449 = vadd.f32 %v1445, 0.2548296
    %v1450 = vadd.f32 %v1446, 0.2548296
    %v1451 = vmul.f32 %v1447, %v1412
    %v1452 = vmul.f32 %v1448, %v1414
    %v1453 = vmul.f32 %v1449, %v1416
    %v1454 = vmul.f32 %v1450, %v1418
    %v1455 = vsub.f32 0.0, %v1399
    %v1456 = vsub.f32 0.0, %v1400
    %v1457 = vsub.f32 0.0, %v1401
    %v1458 = vsub.f32 0.0, %v1402
    %v1459 = vmul.f32 %v1455, %v1399
    %v1460 = vmul.f32 %v1456, %v1400
    %v1461 = vmul.f32 %v1457, %v1401
    %v1462 = vmul.f32 %v1458, %v1402
    %v1463 = vmul.f32 %v1459, 1.442695
    %v1464 = vpow.pop %v1463
    %v1465 = vmul.f32 %v1460, 1.442695
    %v1466 = vpow.pop %v1465
    %v1467 = vmul.f32 %v1461, 1.442695
    %v1468 = vpow.pop %v1467
    %v1469 = vmul.f32 %v1462, 1.442695
    %v1470 = vpow.pop %v1469
    %v1471 = vmul.f32 %v1451, %v1464
    %v1472 = vmul.f32 %v1452, %v1466
    %v1473 = vmul.f32 %v1453, %v1468
    %v1474 = vmul.f32 %v1454, %v1470
    %v1475 = vsub.f32 1.0, %v1471
    %v1476 = vsub.f32 1.0, %v1472
    %v1477 = vsub.f32 1.0, %v1473
    %v1478 = vsub.f32 1.0, %v1474
    %vm1479 = vcmp.ge.f32.partialorder %v1395, 0.0
    %vm1480 = vcmp.ge.f32.partialorder %v1396, 0.0
    %vm1481 = vcmp.ge.f32.partialorder %v1397, 0.0
    %vm1482 = vcmp.ge.f32.partialorder %v1398, 0.0
    %v1483 = vsub.f32 0.0, %v1475
    %v1484 = vsub.f32 0.0, %v1476
    %v1485 = vsub.f32 0.0, %v1477
    %v1486 = vsub.f32 0.0, %v1478
    %v1487 = vsel %vm1479, %v1475, %v1483
    %v1488 = vsel %vm1480, %v1476, %v1484
    %v1489 = vsel %vm1481, %v1477, %v1485
    %v1490 = vsel %vm1482, %v1478, %v1486
    %v1491 = vadd.f32 %v1487, 1.0
    %v1492 = vadd.f32 %v1488, 1.0
    %v1493 = vadd.f32 %v1489, 1.0
    %v1494 = vadd.f32 %v1490, 1.0
    %v1495 = vmul.f32 %v1391, %v1491
    %v1496 = vmul.f32 %v1392, %v1492
    %v1497 = vmul.f32 %v1393, %v1493
    %v1498 = vmul.f32 %v1394, %v1494
    %v1499 = vadd.f32 %v1495, %v43
    %v1500 = vadd.f32 %v1496, %v44
    %v1501 = vadd.f32 %v1497, %v45
    %v1502 = vadd.f32 %v1498, %v46
    %v1503 = vadd.f32 %v1499, %v1500
    %v1504 = vadd.f32 %v1503, %v1501
    %v1505 = vadd.f32 %v1504, %v1502
    %1506 = vadd.xlane.f32.xlu0 %v1505
    %v1507 = vpop.xlane.xlu0 %1506
    %v1508 = vrot.slane %v1507, 4
    %v1509 = vadd.f32 %v1507, %v1508
    %v1510 = vrot.slane %v1509, 2
    %v1511 = vadd.f32 %v1509, %v1510
    %v1512 = vrot.slane %v1511, 1
    %v1513 = vadd.f32 %v1511, %v1512
    %s1514 = vtos %v1513
    %s1515 = smul.f32 %s1514, 0.00024414063
    %v1516 = vmul.f32 %v1499, %v1499
    %v1517 = vmul.f32 %v1500, %v1500
    %v1518 = vmul.f32 %v1501, %v1501
    %v1519 = vmul.f32 %v1502, %v1502
    %v1520 = vadd.f32 %v1516, %v1517
    %v1521 = vadd.f32 %v1520, %v1518
    %v1522 = vadd.f32 %v1521, %v1519
    %1523 = vadd.xlane.f32.xlu0 %v1522
    %v1524 = vpop.xlane.xlu0 %1523
    %v1525 = vrot.slane %v1524, 4
    %v1526 = vadd.f32 %v1524, %v1525
    %v1527 = vrot.slane %v1526, 2
    %v1528 = vadd.f32 %v1526, %v1527
    %v1529 = vrot.slane %v1528, 1
    %v1530 = vadd.f32 %v1528, %v1529
    %s1531 = vtos %v1530
    %s1532 = smul.f32 %s1531, 0.00024414063
    %s1533 = smul.f32 %s1515, %s1515
    %s1534 = ssub.f32 %s1532, %s1533
    %v1535 = vstv %s1515
    %v1536 = vsub.f32 %v1499, %v1535
    %v1537 = vsub.f32 %v1500, %v1535
    %v1538 = vsub.f32 %v1501, %v1535
    %v1539 = vsub.f32 %v1502, %v1535
    %s1540 = sadd.f32 %s1534, 1e-05
    %v1541 = vstv %s1540
    %v1542 = vrsqrt.pop %v1541
    %s1543 = vtos %v1542
    %v1544 = vstv %s1543
    %v1545 = vmul.f32 %v1536, %v1544
    %v1546 = vmul.f32 %v1537, %v1544
    %v1547 = vmul.f32 %v1538, %v1544
    %v1548 = vmul.f32 %v1539, %v1544
    %v1549 = vld [vmem:[%s4] sm:$0xff]
    %v1550 = vld [vmem:[%s4 + $0x8] sm:$0xff]
    %v1551 = vld [vmem:[%s6] sm:$0xff]
    %v1552 = vld [vmem:[%s6 + $0x8] sm:$0xff]
    %1554 = vset.pattern.permute.xlu0 0
    %1555 = vperm.xlu0 %1554, %v1551
    %v1556 = vpop.permute.xlu0 %1555
    %1559 = vset.pattern.permute.xlu0 0
    %1560 = vperm.xlu0 %1559, %v1552
    %v1561 = vpop.permute.xlu0 %1560
    %v1564 = vsel %vm722, %v1549, 0
    %v1567 = vsel %vm722, %v1550, 0
    %1569 = vmatprep.subr.mxu0 0.0
    %1570 = vmatpush1.msra.mxu0 0.0
    %1571 = vmatprep.subr.mxu0 0.0
    %1572 = vmatpush1.msra.mxu0 0.0
    %1573 = vmatprep.subr.mxu0 0.0
    %1574 = vmatpush1.msra.mxu0 0.0
    %1575 = vmatprep.subr.mxu0 0.0
    %1576 = vmatpush1.msra.mxu0 0.0
    %1577 = vmatprep.subr.mxu0 0.0
    %1578 = vmatpush1.msra.mxu0 0.0
    %1579 = vmatprep.subr.mxu0 0.0
    %1580 = vmatpush1.msra.mxu0 0.0
    %1581 = vmatprep.subr.mxu0 0.0
    %1582 = vmatpush1.msra.mxu0 0.0
    %1583 = vmatprep.subr.mxu0 0.0
    %1584 = vmatpush1.msra.mxu0 0.0
    %1585 = vmatprep.subr.mxu0 0.0
    %1586 = vmatpush1.msra.mxu0 0.0
    %1587 = vmatprep.subr.mxu0 0.0
    %1588 = vmatpush1.msra.mxu0 0.0
    %1589 = vmatprep.subr.mxu0 0.0
    %1590 = vmatpush1.msra.mxu0 0.0
    %1591 = vmatprep.subr.mxu0 0.0
    %1592 = vmatpush1.msra.mxu0 0.0
    %1593 = vmatprep.subr.mxu0 0.0
    %1594 = vmatpush1.msra.mxu0 0.0
    %1595 = vmatprep.subr.mxu0 0.0
    %1596 = vmatpush1.msra.mxu0 0.0
    %1597 = vmatprep.subr.mxu0 %v1548
    %1598 = vmatpush1.msra.mxu0 %v1547
    %1599 = vmatprep.subr.mxu0 %v1546
    %1600 = vmatpush1.msra.mxu0 %v1545
    %1601 = vmatprep.subr.mxu0 0.0
    %1602 = vmatpush2.msra.mxu0 0.0
    %1603 = vmatprep.subr.mxu0 0.0
    %1604 = vmatpush2.msra.mxu0 0.0
    %1605 = vmatprep.subr.mxu0 0.0
    %1606 = vmatpush2.msra.mxu0 0.0
    %1607 = vmatprep.subr.mxu0 0.0
    %1608 = vmatpush2.msra.mxu0 0.0
    %1609 = vmatprep.subr.mxu0 0.0
    %1610 = vmatpush2.msra.mxu0 0.0
    %1611 = vmatprep.subr.mxu0 0.0
    %1612 = vmatpush2.msra.mxu0 0.0
    %1613 = vmatprep.subr.mxu0 0.0
    %1614 = vmatpush2.msra.mxu0 0.0
    %1615 = vmatprep.subr.mxu0 0.0
    %1616 = vmatpush2.msra.mxu0 0.0
    %1617 = vmatprep.subr.mxu0 0.0
    %1618 = vmatpush2.msra.mxu0 0.0
    %1619 = vmatprep.subr.mxu0 0.0
    %1620 = vmatpush2.msra.mxu0 0.0
    %1621 = vmatprep.subr.mxu0 0.0
    %1622 = vmatpush2.msra.mxu0 0.0
    %1623 = vmatprep.subr.mxu0 0.0
    %1624 = vmatpush2.msra.mxu0 0.0
    %1625 = vmatprep.subr.mxu0 0.0
    %1626 = vmatpush2.msra.mxu0 0.0
    %1627 = vmatprep.subr.mxu0 0.0
    %1628 = vmatpush2.msra.mxu0 0.0
    %1629 = vmatprep.subr.mxu0 0.0
    %1630 = vmatpush2.msra.mxu0 0.0
    %1631 = vmatprep.subr.mxu0 0.0
    %1632 = vmatpush2.msra.mxu0 0.0
    %1633 = vmatprep.mubr.f32.mxu0 0.0
    %1634 = vmatmul.mubr.f32.gmra.mxu0 %v1564
    %v1635 = vpop.f32.mrf.mxu0
    %v1636 = vadd.f32 %v1556, %v1635
    %v1637 = vpop.f32.mrf.mxu0
    %v1638 = vadd.f32 %v1556, %v1637
    %1639 = vmatprep.mubr.f32.mxu0 0.0
    %1640 = vmatmul.mubr.f32.gmra.mxu0 %v1567
    %v1641 = vpop.f32.mrf.mxu0
    %v1642 = vadd.f32 %v1561, %v1641
    %v1643 = vpop.f32.mrf.mxu0
    %v1644 = vadd.f32 %v1561, %v1643
    %1645 = vdwg.mxu0
    %v1646 = vmul.f32 %v1636, 0.5
    %v1647 = vmul.f32 %v1638, 0.5
    %v1648 = vmul.f32 %v1642, 0.5
    %v1649 = vmul.f32 %v1644, 0.5
    %v1650 = vmul.f32 %v1636, 0.70710677
    %v1651 = vmul.f32 %v1638, 0.70710677
    %v1652 = vmul.f32 %v1642, 0.70710677
    %v1653 = vmul.f32 %v1644, 0.70710677
    %v1654 = vand.u32 2147483647, %v1650
    %v1655 = vand.u32 2147483647, %v1651
    %v1656 = vand.u32 2147483647, %v1652
    %v1657 = vand.u32 2147483647, %v1653
    %v1658 = vmul.f32 %v1654, 0.3275911
    %v1659 = vmul.f32 %v1655, 0.3275911
    %v1660 = vmul.f32 %v1656, 0.3275911
    %v1661 = vmul.f32 %v1657, 0.3275911
    %v1662 = vadd.f32 %v1658, 1.0
    %v1663 = vadd.f32 %v1659, 1.0
    %v1664 = vadd.f32 %v1660, 1.0
    %v1665 = vadd.f32 %v1661, 1.0
    %v1666 = vrcp.pop %v1662
    %v1667 = vmul.f32 1.0, %v1666
    %v1668 = vrcp.pop %v1663
    %v1669 = vmul.f32 1.0, %v1668
    %v1670 = vrcp.pop %v1664
    %v1671 = vmul.f32 1.0, %v1670
    %v1672 = vrcp.pop %v1665
    %v1673 = vmul.f32 1.0, %v1672
    %v1674 = vmul.f32 %v1667, 1.0614054
    %v1675 = vmul.f32 %v1669, 1.0614054
    %v1676 = vmul.f32 %v1671, 1.0614054
    %v1677 = vmul.f32 %v1673, 1.0614054
    %v1678 = vadd.f32 %v1674, -1.4531521
    %v1679 = vadd.f32 %v1675, -1.4531521
    %v1680 = vadd.f32 %v1676, -1.4531521
    %v1681 = vadd.f32 %v1677, -1.4531521
    %v1682 = vmul.f32 %v1678, %v1667
    %v1683 = vmul.f32 %v1679, %v1669
    %v1684 = vmul.f32 %v1680, %v1671
    %v1685 = vmul.f32 %v1681, %v1673
    %v1686 = vadd.f32 %v1682, 1.4214138
    %v1687 = vadd.f32 %v1683, 1.4214138
    %v1688 = vadd.f32 %v1684, 1.4214138
    %v1689 = vadd.f32 %v1685, 1.4214138
    %v1690 = vmul.f32 %v1686, %v1667
    %v1691 = vmul.f32 %v1687, %v1669
    %v1692 = vmul.f32 %v1688, %v1671
    %v1693 = vmul.f32 %v1689, %v1673
    %v1694 = vadd.f32 %v1690, -0.28449672
    %v1695 = vadd.f32 %v1691, -0.28449672
    %v1696 = vadd.f32 %v1692, -0.28449672
    %v1697 = vadd.f32 %v1693, -0.28449672
    %v1698 = vmul.f32 %v1694, %v1667
    %v1699 = vmul.f32 %v1695, %v1669
    %v1700 = vmul.f32 %v1696, %v1671
    %v1701 = vmul.f32 %v1697, %v1673
    %v1702 = vadd.f32 %v1698, 0.2548296
    %v1703 = vadd.f32 %v1699, 0.2548296
    %v1704 = vadd.f32 %v1700, 0.2548296
    %v1705 = vadd.f32 %v1701, 0.2548296
    %v1706 = vmul.f32 %v1702, %v1667
    %v1707 = vmul.f32 %v1703, %v1669
    %v1708 = vmul.f32 %v1704, %v1671
    %v1709 = vmul.f32 %v1705, %v1673
    %v1710 = vsub.f32 0.0, %v1654
    %v1711 = vsub.f32 0.0, %v1655
    %v1712 = vsub.f32 0.0, %v1656
    %v1713 = vsub.f32 0.0, %v1657
    %v1714 = vmul.f32 %v1710, %v1654
    %v1715 = vmul.f32 %v1711, %v1655
    %v1716 = vmul.f32 %v1712, %v1656
    %v1717 = vmul.f32 %v1713, %v1657
    %v1718 = vmul.f32 %v1714, 1.442695
    %v1719 = vpow.pop %v1718
    %v1720 = vmul.f32 %v1715, 1.442695
    %v1721 = vpow.pop %v1720
    %v1722 = vmul.f32 %v1716, 1.442695
    %v1723 = vpow.pop %v1722
    %v1724 = vmul.f32 %v1717, 1.442695
    %v1725 = vpow.pop %v1724
    %v1726 = vmul.f32 %v1706, %v1719
    %v1727 = vmul.f32 %v1707, %v1721
    %v1728 = vmul.f32 %v1708, %v1723
    %v1729 = vmul.f32 %v1709, %v1725
    %v1730 = vsub.f32 1.0, %v1726
    %v1731 = vsub.f32 1.0, %v1727
    %v1732 = vsub.f32 1.0, %v1728
    %v1733 = vsub.f32 1.0, %v1729
    %vm1734 = vcmp.ge.f32.partialorder %v1650, 0.0
    %vm1735 = vcmp.ge.f32.partialorder %v1651, 0.0
    %vm1736 = vcmp.ge.f32.partialorder %v1652, 0.0
    %vm1737 = vcmp.ge.f32.partialorder %v1653, 0.0
    %v1738 = vsub.f32 0.0, %v1730
    %v1739 = vsub.f32 0.0, %v1731
    %v1740 = vsub.f32 0.0, %v1732
    %v1741 = vsub.f32 0.0, %v1733
    %v1742 = vsel %vm1734, %v1730, %v1738
    %v1743 = vsel %vm1735, %v1731, %v1739
    %v1744 = vsel %vm1736, %v1732, %v1740
    %v1745 = vsel %vm1737, %v1733, %v1741
    %v1746 = vadd.f32 %v1742, 1.0
    %v1747 = vadd.f32 %v1743, 1.0
    %v1748 = vadd.f32 %v1744, 1.0
    %v1749 = vadd.f32 %v1745, 1.0
    %v1750 = vmul.f32 %v1646, %v1746
    %v1751 = vmul.f32 %v1647, %v1747
    %v1752 = vmul.f32 %v1648, %v1748
    %v1753 = vmul.f32 %v1649, %v1749
    %v1754 = vadd.f32 %v1750, %v1545
    %v1755 = vadd.f32 %v1751, %v1546
    %v1756 = vadd.f32 %v1752, %v1547
    %v1757 = vadd.f32 %v1753, %v1548
    %v1758 = vadd.f32 %v1754, %v1755
    %v1759 = vadd.f32 %v1758, %v1756
    %v1760 = vadd.f32 %v1759, %v1757
    %1761 = vadd.xlane.f32.xlu0 %v1760
    %v1762 = vpop.xlane.xlu0 %1761
    %v1763 = vrot.slane %v1762, 4
    %v1764 = vadd.f32 %v1762, %v1763
    %v1765 = vrot.slane %v1764, 2
    %v1766 = vadd.f32 %v1764, %v1765
    %v1767 = vrot.slane %v1766, 1
    %v1768 = vadd.f32 %v1766, %v1767
    %s1769 = vtos %v1768
    %s1770 = smul.f32 %s1769, 0.00024414063
    %v1771 = vmul.f32 %v1754, %v1754
    %v1772 = vmul.f32 %v1755, %v1755
    %v1773 = vmul.f32 %v1756, %v1756
    %v1774 = vmul.f32 %v1757, %v1757
    %v1775 = vadd.f32 %v1771, %v1772
    %v1776 = vadd.f32 %v1775, %v1773
    %v1777 = vadd.f32 %v1776, %v1774
    %1778 = vadd.xlane.f32.xlu0 %v1777
    %v1779 = vpop.xlane.xlu0 %1778
    %v1780 = vrot.slane %v1779, 4
    %v1781 = vadd.f32 %v1779, %v1780
    %v1782 = vrot.slane %v1781, 2
    %v1783 = vadd.f32 %v1781, %v1782
    %v1784 = vrot.slane %v1783, 1
    %v1785 = vadd.f32 %v1783, %v1784
    %s1786 = vtos %v1785
    %s1787 = smul.f32 %s1786, 0.00024414063
    %s1788 = smul.f32 %s1770, %s1770
    %s1789 = ssub.f32 %s1787, %s1788
    %v1790 = vstv %s1770
    %v1791 = vsub.f32 %v1754, %v1790
    %v1792 = vsub.f32 %v1755, %v1790
    %v1793 = vsub.f32 %v1756, %v1790
    %v1794 = vsub.f32 %v1757, %v1790
    %s1795 = sadd.f32 %s1789, 1e-05
    %v1796 = vstv %s1795
    %v1797 = vrsqrt.pop %v1796
    %s1798 = vtos %v1797
    %v1799 = vstv %s1798
    %v1800 = vmul.f32 %v1791, %v1799
    %v1801 = vmul.f32 %v1792, %v1799
    %v1802 = vmul.f32 %v1793, %v1799
    %v1803 = vmul.f32 %v1794, %v1799
    %1804 = vst [vmem:[#allocation2] sm:$0xff] %v1800
    %1805 = vst [vmem:[#allocation2 + $0x8] sm:$0xff] %v1801
    %1806 = vst [vmem:[#allocation2 + $0x10] sm:$0xff] %v1802
    %1807 = vst [vmem:[#allocation2 + $0x18] sm:$0xff] %v1803
    %v1808 = vld [vmem:[%s10] sm:$0xff]
    %v1809 = vld [vmem:[%s10 + $0x8] sm:$0xff]
    %v1810 = vld [vmem:[%s10 + $0x10] sm:$0xff]
    %v1811 = vld [vmem:[%s10 + $0x18] sm:$0xff]
    %v1812 = vld [vmem:[%s10 + $0x20] sm:$0xff]
    %v1813 = vld [vmem:[%s10 + $0x28] sm:$0xff]
    %v1814 = vld [vmem:[%s10 + $0x30] sm:$0xff]
    %v1815 = vld [vmem:[%s10 + $0x38] sm:$0xff]
    %v1816 = vld [vmem:[%s10 + $0x40] sm:$0xff]
    %v1817 = vld [vmem:[%s10 + $0x48] sm:$0xff]
    %v1818 = vld [vmem:[%s10 + $0x50] sm:$0xff]
    %v1819 = vld [vmem:[%s10 + $0x58] sm:$0xff]
    %v1820 = vld [vmem:[%s10 + $0x60] sm:$0xff]
    %v1821 = vld [vmem:[%s10 + $0x68] sm:$0xff]
    %v1822 = vld [vmem:[%s10 + $0x70] sm:$0xff]
    %v1823 = vld [vmem:[%s10 + $0x78] sm:$0xff]
    %v1824 = vld [vmem:[%s10 + $0x80] sm:$0xff]
    %v1825 = vld [vmem:[%s10 + $0x88] sm:$0xff]
    %v1826 = vld [vmem:[%s10 + $0x90] sm:$0xff]
    %v1827 = vld [vmem:[%s10 + $0x98] sm:$0xff]
    %v1828 = vld [vmem:[%s10 + $0xa0] sm:$0xff]
    %v1829 = vld [vmem:[%s10 + $0xa8] sm:$0xff]
    %v1830 = vld [vmem:[%s10 + $0xb0] sm:$0xff]
    %v1831 = vld [vmem:[%s10 + $0xb8] sm:$0xff]
    %v1832 = vld [vmem:[%s10 + $0xc0] sm:$0xff]
    %v1833 = vld [vmem:[%s10 + $0xc8] sm:$0xff]
    %v1834 = vld [vmem:[%s10 + $0xd0] sm:$0xff]
    %v1835 = vld [vmem:[%s10 + $0xd8] sm:$0xff]
    %v1836 = vld [vmem:[%s10 + $0xe0] sm:$0xff]
    %v1837 = vld [vmem:[%s10 + $0xe8] sm:$0xff]
    %v1838 = vld [vmem:[%s10 + $0xf0] sm:$0xff]
    %v1839 = vld [vmem:[%s10 + $0xf8] sm:$0xff]
    %1840 = vmatprep.subr.mxu0 0.0
    %1841 = vmatpush1.msra.mxu0 %v1823
    %1842 = vmatprep.subr.mxu0 0.0
    %1843 = vmatpush1.msra.mxu0 %v1822
    %1844 = vmatprep.subr.mxu0 0.0
    %1845 = vmatpush1.msra.mxu0 %v1821
    %1846 = vmatprep.subr.mxu0 0.0
    %1847 = vmatpush1.msra.mxu0 %v1820
    %1848 = vmatprep.subr.mxu0 0.0
    %1849 = vmatpush1.msra.mxu0 %v1819
    %1850 = vmatprep.subr.mxu0 0.0
    %1851 = vmatpush1.msra.mxu0 %v1818
    %1852 = vmatprep.subr.mxu0 0.0
    %1853 = vmatpush1.msra.mxu0 %v1817
    %1854 = vmatprep.subr.mxu0 0.0
    %1855 = vmatpush1.msra.mxu0 %v1816
    %1856 = vmatprep.subr.mxu0 0.0
    %1857 = vmatpush1.msra.mxu0 %v1815
    %1858 = vmatprep.subr.mxu0 0.0
    %1859 = vmatpush1.msra.mxu0 %v1814
    %1860 = vmatprep.subr.mxu0 0.0
    %1861 = vmatpush1.msra.mxu0 %v1813
    %1862 = vmatprep.subr.mxu0 0.0
    %1863 = vmatpush1.msra.mxu0 %v1812
    %1864 = vmatprep.subr.mxu0 0.0
    %1865 = vmatpush1.msra.mxu0 %v1811
    %1866 = vmatprep.subr.mxu0 0.0
    %1867 = vmatpush1.msra.mxu0 %v1810
    %1868 = vmatprep.subr.mxu0 0.0
    %1869 = vmatpush1.msra.mxu0 %v1809
    %1870 = vmatprep.subr.mxu0 0.0
    %1871 = vmatpush1.msra.mxu0 %v1808
    %1872 = vmatprep.subr.mxu0 0.0
    %1873 = vmatpush2.msra.mxu0 %v1839
    %1874 = vmatprep.subr.mxu0 0.0
    %1875 = vmatpush2.msra.mxu0 %v1838
    %1876 = vmatprep.subr.mxu0 0.0
    %1877 = vmatpush2.msra.mxu0 %v1837
    %1878 = vmatprep.subr.mxu0 0.0
    %1879 = vmatpush2.msra.mxu0 %v1836
    %1880 = vmatprep.subr.mxu0 0.0
    %1881 = vmatpush2.msra.mxu0 %v1835
    %1882 = vmatprep.subr.mxu0 0.0
    %1883 = vmatpush2.msra.mxu0 %v1834
    %1884 = vmatprep.subr.mxu0 0.0
    %1885 = vmatpush2.msra.mxu0 %v1833
    %1886 = vmatprep.subr.mxu0 0.0
    %1887 = vmatpush2.msra.mxu0 %v1832
    %1888 = vmatprep.subr.mxu0 0.0
    %1889 = vmatpush2.msra.mxu0 %v1831
    %1890 = vmatprep.subr.mxu0 0.0
    %1891 = vmatpush2.msra.mxu0 %v1830
    %1892 = vmatprep.subr.mxu0 0.0
    %1893 = vmatpush2.msra.mxu0 %v1829
    %1894 = vmatprep.subr.mxu0 0.0
    %1895 = vmatpush2.msra.mxu0 %v1828
    %1896 = vmatprep.subr.mxu0 0.0
    %1897 = vmatpush2.msra.mxu0 %v1827
    %1898 = vmatprep.subr.mxu0 0.0
    %1899 = vmatpush2.msra.mxu0 %v1826
    %1900 = vmatprep.subr.mxu0 0.0
    %1901 = vmatpush2.msra.mxu0 %v1825
    %1902 = vmatprep.subr.mxu0 0.0
    %1903 = vmatpush2.msra.mxu0 %v1824
    %1904 = vmatprep.mubr.f32.mxu0 %v1801
    %1905 = vmatmul.mubr.f32.gmra.mxu0 %v1800
    %v1906 = vpop.f32.mrf.mxu0
    %v1907 = vadd.f32 0.0, %v1906
    %v1908 = vpop.f32.mrf.mxu0
    %1909 = vmatprep.mubr.f32.mxu0 %v1803
    %1910 = vmatmul.mubr.f32.gmra.mxu0 %v1802
    %v1911 = vpop.f32.mrf.mxu0
    %v1912 = vadd.f32 0.0, %v1911
    %v1913 = vpop.f32.mrf.mxu0
    %1914 = vdwg.mxu0
    %1915 = vst.msk [vmem:[#allocation4] sm:$0xff] %vm722, %v1907
    %1916 = vst.msk [vmem:[#allocation4 + $0x8] sm:$0xff] %vm722, %v1912
    // Predicated region
    $region46: #{tpu_custom_call.1} parent=1 // pred_check
      _
    $region47: #{tpu_custom_call.1} parent=1 // pred_check_branch
      %1918 = sbr.rel (0) target = $region49
    $region48: #{tpu_custom_call.1} parent=1 // pred_region
      %s1920 = ssub.s32 512, 512
      %1921 = vsyncadd [#allocation3], %s1920
      %s1922 = sshll.u32 [#allocation2], 4
      %s1923 = int_to_ptr.vmem [resolvable:$true] %s1922
      %1928 = dma.vmem_to_hbm [thread:$0]  %s1923, 512, %s11, [#allocation3], 256, 256, 16
    $region49: #{tpu_custom_call.1} parent=1 // pred_fallthru
      _
    // Predicated region
    $region50: #{tpu_custom_call.1} parent=1 // pred_check
      _
    $region51: #{tpu_custom_call.1} parent=1 // pred_check_branch
      %1930 = sbr.rel (0) target = $region53
    $region52: #{tpu_custom_call.1} parent=1 // pred_region
      %s1932 = ssub.s32 256, 256
      %1933 = vsyncadd [#allocation5], %s1932
      %s1934 = sshll.u32 [#allocation4], 4
      %s1935 = int_to_ptr.vmem [resolvable:$true] %s1934
      %1940 = dma.vmem_to_hbm [thread:$0]  %s1935, 256, %s12, [#allocation5], 128, 128, 8
    $region53: #{tpu_custom_call.1} parent=1 // pred_fallthru
      _
    // Predicated region
    $region54: #{tpu_custom_call.1} parent=1 // pred_check
      _
    $region55: #{tpu_custom_call.1} parent=1 // pred_check_branch
      %1942 = sbr.rel (0) target = $region57
    $region56: #{tpu_custom_call.1} parent=1 // pred_region
      %1943 = dma.done [#allocation3], 512
    $region57: #{tpu_custom_call.1} parent=1 // pred_fallthru
      _
    // Predicated region
    $region58: #{tpu_custom_call.1} parent=1 // pred_check
      _
    $region59: #{tpu_custom_call.1} parent=1 // pred_check_branch
      %1945 = sbr.rel (0) target = $region61
    $region60: #{tpu_custom_call.1} parent=1 // pred_region
      %1946 = dma.done [#allocation5], 256
    $region61: #{tpu_custom_call.1} parent=1 // pred_fallthru
      _
    %1947 = vsyncpa [#allocation3], 1
    %1948 = vsyncpa [#allocation5], 1

</llo_original>
